<compile_context>
chip_gen: v7x
topology: tpu7x:2x2x1
jax: 0.10.0
libtpu: 0.0.40
codegen_flags: <defaults>
</compile_context>

<pallas_src>
import functools
import math

import jax
import jax.numpy as jnp
from jax.experimental import pallas as pl
from jax.experimental.pallas import tpu as pltpu

# ---------------- small synthetic BERT config ----------------
VOCAB = 100
HIDDEN = 32
N_LAYERS = 2
N_HEADS = 2
HEAD_DIM = HIDDEN // N_HEADS
INTERMEDIATE = 64
MAX_POS = 16
TYPE_VOCAB = 2
LN_EPS = 1e-12
POOLING = "first_last"   # mirrors args.pooling  ('cls' or 'first_last')

LANES = 128              # lane width of the bias/LN vector slab
VROWS = 8                # rows per layer in the vector slab

assert INTERMEDIATE >= HIDDEN  # ffn slab packing assumes this


def _recip(x):
    # EUP reciprocal if available (free VLIW slot), else plain divide.
    if hasattr(pl, "reciprocal"):
        return pl.reciprocal(x, approx=True)
    return 1.0 / x


def _compiler_params():
    cls = getattr(pltpu, "CompilerParams", None) or getattr(pltpu, "TPUCompilerParams", None)
    if cls is None:
        return None
    return cls(dimension_semantics=("parallel",))


# ---------------- fused Pallas kernel (whole model, one batch element per grid step) ----
def _bert_kernel(x_ref, mask_ref, wqkvo_ref, ffn_ref, vec_ref, o_ref, *,
                 n_layers, n_heads, head_dim, seq, hidden, inter, eps, pooling):
    scale = 1.0 / math.sqrt(head_dim)
    gelu_c = math.sqrt(2.0 / math.pi)

    def layernorm(v, g, b):
        mean = jnp.mean(v, axis=-1, keepdims=True)
        vc = v - mean
        var = jnp.mean(vc * vc, axis=-1, keepdims=True)
        return vc * jax.lax.rsqrt(var + eps) * g + b

    x = x_ref[0]                       # (S, H) — this batch element's embeddings
    mask = mask_ref[0]                 # (1, S) additive bias over key positions

    # hidden_states[0]: embedding LayerNorm.
    h = layernorm(x, vec_ref[0, 0:1, 0:hidden], vec_ref[0, 1:2, 0:hidden])
    h_first = h

    for l in range(n_layers):
        # -------- self-attention: fused QKV matmul over all heads --------
        wqkv = wqkvo_ref[l, :, 0:3 * hidden]            # (H, 3H)
        wo = wqkvo_ref[l, :, 3 * hidden:4 * hidden]     # (H, H)
        bqkv = vec_ref[l + 1, 0:1, 0:3 * hidden]        # (1, 3H)
        qkv = jnp.dot(h, wqkv, preferred_element_type=jnp.float32) + bqkv   # (S, 3H)

        ctx_heads = []
        for hh in range(n_heads):
            q = qkv[:, hh * head_dim:(hh + 1) * head_dim]
            k = qkv[:, hidden + hh * head_dim:hidden + (hh + 1) * head_dim]
            v = qkv[:, 2 * hidden + hh * head_dim:2 * hidden + (hh + 1) * head_dim]
            # scores = q @ k.T  (contract head_dim of both operands)
            s = jax.lax.dot_general(q, k, (((1,), (1,)), ((), ())),
                                    preferred_element_type=jnp.float32)    # (S, S)
            s = s * scale + mask
            s = s - jnp.max(s, axis=-1, keepdims=True)
            p = jnp.exp(s)
            p = p * _recip(jnp.sum(p, axis=-1, keepdims=True))
            ctx_heads.append(jnp.dot(p, v, preferred_element_type=jnp.float32))  # (S, dh)
        ctx = jnp.concatenate(ctx_heads, axis=-1)        # (S, H) — tiny lane concat

        attn = (jnp.dot(ctx, wo, preferred_element_type=jnp.float32)
                + vec_ref[l + 1, 1:2, 0:hidden])
        h = layernorm(attn + h, vec_ref[l + 1, 2:3, 0:hidden], vec_ref[l + 1, 3:4, 0:hidden])

        # -------- feed-forward --------
        w1 = ffn_ref[l, 0:hidden, :]                     # (H, I)
        w2 = ffn_ref[l, hidden:hidden + inter, 0:hidden]  # (I, H)
        f = jnp.dot(h, w1, preferred_element_type=jnp.float32) + vec_ref[l + 1, 4:5, 0:inter]
        # TODO(synk): HF BERT default is exact (erf) GELU; tanh approximation used here.
        f = 0.5 * f * (1.0 + jnp.tanh(gelu_c * (f + 0.044715 * f * f * f)))
        f = jnp.dot(f, w2, preferred_element_type=jnp.float32) + vec_ref[l + 1, 5:6, 0:hidden]
        h = layernorm(f + h, vec_ref[l + 1, 6:7, 0:hidden], vec_ref[l + 1, 7:8, 0:hidden])

        if l == 0:
            h_first = h                                  # hidden_states[1]

    # -------- pooling (in-kernel reduction / select; no selection matmul) --------
    if pooling == "first_last":
        pooled = jnp.mean(h + h_first, axis=0, keepdims=True)   # (1, H)
    else:  # 'cls' -> output[0][:, -1, :]  (last token of final layer)
        pooled = h[seq - 1:seq, :]
    o_ref[0] = pooled


# ---------------- parameters ----------------
def init_params(key):
    def normal(k, shape):
        return 0.02 * jax.random.normal(k, shape, dtype=jnp.float32)

    keys = iter(jax.random.split(key, 3 + 6 * N_LAYERS))
    params = {
        "word_emb": normal(next(keys), (VOCAB, HIDDEN)),
        "pos_emb": normal(next(keys), (MAX_POS, HIDDEN)),
        "type_emb": normal(next(keys), (TYPE_VOCAB, HIDDEN)),
        "emb_ln_g": jnp.ones((1, HIDDEN), jnp.float32),
        "emb_ln_b": jnp.zeros((1, HIDDEN), jnp.float32),
        "layers": [],
    }
    for _ in range(N_LAYERS):
        layer = {
            "wq": normal(next(keys), (HIDDEN, HIDDEN)), "bq": jnp.zeros((HIDDEN,), jnp.float32),
            "wk": normal(next(keys), (HIDDEN, HIDDEN)), "bk": jnp.zeros((HIDDEN,), jnp.float32),
            "wv": normal(next(keys), (HIDDEN, HIDDEN)), "bv": jnp.zeros((HIDDEN,), jnp.float32),
            "wo": normal(next(keys), (HIDDEN, HIDDEN)), "bo": jnp.zeros((HIDDEN,), jnp.float32),
            "ln1_g": jnp.ones((1, HIDDEN), jnp.float32), "ln1_b": jnp.zeros((1, HIDDEN), jnp.float32),
            "w1": normal(next(keys), (HIDDEN, INTERMEDIATE)), "b1": jnp.zeros((INTERMEDIATE,), jnp.float32),
            "w2": normal(next(keys), (INTERMEDIATE, HIDDEN)), "b2": jnp.zeros((HIDDEN,), jnp.float32),
            "ln2_g": jnp.ones((1, HIDDEN), jnp.float32), "ln2_b": jnp.zeros((1, HIDDEN), jnp.float32),
        }
        params["layers"].append(layer)
    return params


def pack_params(params):
    """Pack all weights into a few stacked slabs so the kernel receives only
    5 operands (x, mask, wqkvo, ffn, vec) instead of 21 tiny arrays."""
    layers = params["layers"]

    # (L, H, 4H): columns 0:H=wq, H:2H=wk, 2H:3H=wv, 3H:4H=wo   (lane width 128)
    wqkvo = jnp.stack(
        [jnp.concatenate([l["wq"], l["wk"], l["wv"], l["wo"]], axis=1) for l in layers],
        axis=0).astype(jnp.float32)

    # (L, H+I, I): rows 0:H = w1 (H,I); rows H:H+I lanes 0:H = w2 (I,H)
    ffn_mats = []
    for l in layers:
        w2_pad = jnp.pad(l["w2"], ((0, 0), (0, INTERMEDIATE - HIDDEN)))
        ffn_mats.append(jnp.concatenate([l["w1"], w2_pad], axis=0))
    ffn = jnp.stack(ffn_mats, axis=0).astype(jnp.float32)

    # (L+1, 8, 128): index 0 holds emb LN gamma/beta; index l+1 holds layer l's
    # vectors: [bqkv, bo, ln1_g, ln1_b, b1, b2, ln2_g, ln2_b], zero-padded to 128.
    def _row(v):
        v = jnp.asarray(v, jnp.float32).reshape(-1)
        return jnp.pad(v, (0, LANES - v.shape[0]))

    zero_row = jnp.zeros((LANES,), jnp.float32)
    vec_blocks = [jnp.stack([_row(params["emb_ln_g"]), _row(params["emb_ln_b"])]
                            + [zero_row] * (VROWS - 2), axis=0)]
    for l in layers:
        bqkv = jnp.concatenate([l["bq"], l["bk"], l["bv"]], axis=0)
        vec_blocks.append(jnp.stack(
            [_row(bqkv), _row(l["bo"]), _row(l["ln1_g"]), _row(l["ln1_b"]),
             _row(l["b1"]), _row(l["b2"]), _row(l["ln2_g"]), _row(l["ln2_b"])], axis=0))
    vec = jnp.stack(vec_blocks, axis=0)

    return {
        "word_emb": params["word_emb"],
        "pos_emb": params["pos_emb"],
        "type_emb": params["type_emb"],
        "wqkvo": wqkvo,
        "ffn": ffn,
        "vec": vec,
    }


# ---------------- forward: ONE pallas_call, grid over batch ----------------
@functools.partial(jax.jit, static_argnames=("pooling",))
def model_forward(packed, input_ids, attention_mask, token_type_ids, pooling=POOLING):
    B, S = input_ids.shape
    # Embedding gathers are glue (no clean tiny-vocab Pallas gather equivalent).
    x = (packed["word_emb"][input_ids]
         + packed["pos_emb"][jnp.arange(S)][None, :, :]
         + packed["type_emb"][token_type_ids]).astype(jnp.float32)            # (B, S, H)

    # Additive attention bias over key positions, broadcast in-kernel: (B, 1, S).
    mask_bias = ((1.0 - attention_mask.astype(jnp.float32)) * -10000.0)[:, None, :]

    wqkvo, ffn, vec = packed["wqkvo"], packed["ffn"], packed["vec"]

    kernel = functools.partial(
        _bert_kernel, n_layers=N_LAYERS, n_heads=N_HEADS, head_dim=HEAD_DIM,
        seq=S, hidden=HIDDEN, inter=INTERMEDIATE, eps=LN_EPS, pooling=pooling)

    call_kwargs = {}
    cp = _compiler_params()
    if cp is not None:
        call_kwargs["compiler_params"] = cp
    if hasattr(pl, "CostEstimate"):
        flops = int(B * N_LAYERS * (2 * S * HIDDEN * 3 * HIDDEN
                                    + N_HEADS * 4 * S * S * HEAD_DIM
                                    + 2 * S * HIDDEN * HIDDEN
                                    + 4 * S * HIDDEN * INTERMEDIATE))
        transcendentals = int(B * N_LAYERS * (N_HEADS * S * S + S * INTERMEDIATE + 6 * S))
        bytes_accessed = int(4 * (x.size + mask_bias.size + wqkvo.size
                                  + ffn.size + vec.size + B * HIDDEN))
        call_kwargs["cost_estimate"] = pl.CostEstimate(
            flops=flops, transcendentals=transcendentals, bytes_accessed=bytes_accessed)

    out = pl.pallas_call(
        kernel,
        grid=(B,),
        in_specs=[
            pl.BlockSpec((1, S, HIDDEN), lambda b: (b, 0, 0)),      # x: per-batch block
            pl.BlockSpec((1, 1, S), lambda b: (b, 0, 0)),           # mask: per-batch block
            pl.BlockSpec(wqkvo.shape, lambda b: (0, 0, 0)),         # weights: revisited
            pl.BlockSpec(ffn.shape, lambda b: (0, 0, 0)),
            pl.BlockSpec(vec.shape, lambda b: (0, 0, 0)),
        ],
        out_specs=pl.BlockSpec((1, 1, HIDDEN), lambda b: (b, 0, 0)),
        out_shape=jax.ShapeDtypeStruct((B, 1, HIDDEN), jnp.float32),
        **call_kwargs,
    )(x, mask_bias, wqkvo, ffn, vec)
    return out[:, 0, :]


# ---------------- pure-JAX reference (for a smoke correctness check) ----------------
def reference_forward(params, input_ids, attention_mask, token_type_ids, pooling=POOLING):
    B, S = input_ids.shape
    x = (params["word_emb"][input_ids]
         + params["pos_emb"][jnp.arange(S)][None, :, :]
         + params["type_emb"][token_type_ids])

    def ln(v, g, b):
        mean = jnp.mean(v, -1, keepdims=True)
        vc = v - mean
        var = jnp.mean(vc * vc, -1, keepdims=True)
        return vc * jax.lax.rsqrt(var + LN_EPS) * g + b

    h = ln(x.reshape(B * S, HIDDEN), params["emb_ln_g"], params["emb_ln_b"])
    mask_bias = (1.0 - attention_mask.astype(jnp.float32)) * -10000.0
    hs = [h]
    scale = 1.0 / math.sqrt(HEAD_DIM)
    gelu_c = math.sqrt(2.0 / math.pi)
    for layer in params["layers"]:
        x2 = hs[-1]
        q = x2 @ layer["wq"] + layer["bq"]
        k = x2 @ layer["wk"] + layer["bk"]
        v = x2 @ layer["wv"] + layer["bv"]

        def heads(t):
            return t.reshape(B, S, N_HEADS, HEAD_DIM).transpose(0, 2, 1, 3)

        s = jnp.einsum("bhqd,bhkd->bhqk", heads(q), heads(k)) * scale
        s = s + mask_bias[:, None, None, :]
        p = jax.nn.softmax(s, axis=-1)
        ctx = jnp.einsum("bhqk,bhkd->bhqd", p, heads(v))
        ctx = ctx.transpose(0, 2, 1, 3).reshape(B * S, HIDDEN)
        attn_out = ctx @ layer["wo"] + layer["bo"]
        x2 = ln(attn_out + x2, layer["ln1_g"], layer["ln1_b"])
        f = x2 @ layer["w1"] + layer["b1"]
        f = 0.5 * f * (1.0 + jnp.tanh(gelu_c * (f + 0.044715 * f ** 3)))
        f = f @ layer["w2"] + layer["b2"]
        x2 = ln(f + x2, layer["ln2_g"], layer["ln2_b"])
        hs.append(x2)
    h_last = hs[-1].reshape(B, S, HIDDEN)
    if pooling == "cls":
        return h_last[:, -1, :]
    h_first = hs[1].reshape(B, S, HIDDEN)
    return (h_last + h_first).mean(axis=1)


# ---------------- main ----------------
if __name__ == "__main__":
    key = jax.random.PRNGKey(0)
    k_param, k_ids, k_type = jax.random.split(key, 3)

    B, S = 2, 8
    params = init_params(k_param)
    packed = pack_params(params)

    input_ids = jax.random.randint(k_ids, (B, S), 0, VOCAB, dtype=jnp.int32)
    token_type_ids = jax.random.randint(k_type, (B, S), 0, TYPE_VOCAB, dtype=jnp.int32)
    attention_mask = jnp.ones((B, S), jnp.int32).at[1, 6:].set(0)  # pad tail of seq 1

    out = model_forward(packed, input_ids, attention_mask, token_type_ids, pooling=POOLING)
    out = jax.block_until_ready(out)
    assert out.shape == (B, HIDDEN) and out.dtype == jnp.float32

    ref = reference_forward(params, input_ids, attention_mask, token_type_ids, pooling=POOLING)
    max_diff = float(jnp.max(jnp.abs(out - ref)))
    assert bool(jnp.allclose(out, ref, atol=5e-2, rtol=5e-2)), f"max abs diff {max_diff}"

    print("KERNEL_OK")
</pallas_src>

<mosaic_0001>
module attributes {stable_mosaic.version = 11 : i64} {
  func.func @_bert_kernel(%arg0: i32, %arg1: memref<1x8x32xf32, #tpu.memory_space<vmem>>, %arg2: memref<1x1x8xf32, #tpu.memory_space<vmem>>, %arg3: memref<2x32x128xf32, #tpu.memory_space<vmem>>, %arg4: memref<2x96x64xf32, #tpu.memory_space<vmem>>, %arg5: memref<3x8x128xf32, #tpu.memory_space<vmem>>, %arg6: memref<1x1x32xf32, #tpu.memory_space<vmem>>) attributes {dimension_semantics = [#tpu.dimension_semantics<parallel>], iteration_bounds = array<i64: 2>, scalar_prefetch = 0 : i64, scratch_operands = 0 : i64, tpu.core_type = #tpu.core_type<tc>, window_params = [{transform_indices = @transform_0, window_bounds = array<i64: 1, 8, 32>}, {transform_indices = @transform_1, window_bounds = array<i64: 1, 1, 8>}, {pipeline_mode = #tpu.pipeline_mode<synchronous>, transform_indices = @transform_2, window_bounds = array<i64: 2, 32, 128>}, {pipeline_mode = #tpu.pipeline_mode<synchronous>, transform_indices = @transform_3, window_bounds = array<i64: 2, 96, 64>}, {pipeline_mode = #tpu.pipeline_mode<synchronous>, transform_indices = @transform_4, window_bounds = array<i64: 3, 8, 128>}, {transform_indices = @transform_5, window_bounds = array<i64: 1, 1, 32>}]} {
    %c0 = arith.constant 0 : index
    %c0_0 = arith.constant 0 : index
    %c0_1 = arith.constant 0 : index
    %0 = vector.load %arg1[%c0, %c0_0, %c0_1] : memref<1x8x32xf32, #tpu.memory_space<vmem>>, vector<1x8x32xf32>
    %1 = vector.shape_cast %0 : vector<1x8x32xf32> to vector<8x32xf32>
    %c0_2 = arith.constant 0 : index
    %c0_3 = arith.constant 0 : index
    %c0_4 = arith.constant 0 : index
    %2 = vector.load %arg2[%c0_2, %c0_3, %c0_4] : memref<1x1x8xf32, #tpu.memory_space<vmem>>, vector<1x1x8xf32>
    %3 = vector.shape_cast %2 : vector<1x1x8xf32> to vector<1x8xf32>
    %c0_5 = arith.constant 0 : index
    %c0_6 = arith.constant 0 : index
    %c0_7 = arith.constant 0 : index
    %4 = vector.load %arg5[%c0_5, %c0_6, %c0_7] : memref<3x8x128xf32, #tpu.memory_space<vmem>>, vector<1x1x32xf32>
    %5 = vector.shape_cast %4 : vector<1x1x32xf32> to vector<1x32xf32>
    %c0_8 = arith.constant 0 : index
    %c1 = arith.constant 1 : index
    %c0_9 = arith.constant 0 : index
    %6 = vector.load %arg5[%c0_8, %c1, %c0_9] : memref<3x8x128xf32, #tpu.memory_space<vmem>>, vector<1x1x32xf32>
    %7 = vector.shape_cast %6 : vector<1x1x32xf32> to vector<1x32xf32>
    %cst = arith.constant dense<0.000000e+00> : vector<8xf32>
    %8 = vector.multi_reduction <add>, %1, %cst [1] : vector<8x32xf32> to vector<8xf32>
    %9 = vector.shape_cast %8 : vector<8xf32> to vector<8x1xf32>
    %cst_10 = arith.constant 3.200000e+01 : f32
    %10 = vector.broadcast %cst_10 : f32 to vector<8x1xf32>
    %11 = arith.divf %9, %10 : vector<8x1xf32>
    %12 = vector.broadcast %11 : vector<8x1xf32> to vector<8x32xf32>
    %13 = arith.subf %1, %12 : vector<8x32xf32>
    %14 = arith.mulf %13, %13 : vector<8x32xf32>
    %cst_11 = arith.constant dense<0.000000e+00> : vector<8xf32>
    %15 = vector.multi_reduction <add>, %14, %cst_11 [1] : vector<8x32xf32> to vector<8xf32>
    %16 = vector.shape_cast %15 : vector<8xf32> to vector<8x1xf32>
    %cst_12 = arith.constant 3.200000e+01 : f32
    %17 = vector.broadcast %cst_12 : f32 to vector<8x1xf32>
    %18 = arith.divf %16, %17 : vector<8x1xf32>
    %cst_13 = arith.constant 9.99999996E-13 : f32
    %19 = vector.broadcast %cst_13 : f32 to vector<8x1xf32>
    %20 = arith.addf %18, %19 : vector<8x1xf32>
    %21 = math.rsqrt %20 : vector<8x1xf32>
    %22 = vector.broadcast %21 : vector<8x1xf32> to vector<8x32xf32>
    %23 = arith.mulf %13, %22 : vector<8x32xf32>
    %24 = vector.broadcast %5 : vector<1x32xf32> to vector<8x32xf32>
    %25 = arith.mulf %23, %24 : vector<8x32xf32>
    %26 = vector.broadcast %7 : vector<1x32xf32> to vector<8x32xf32>
    %27 = arith.addf %25, %26 : vector<8x32xf32>
    %c0_14 = arith.constant 0 : index
    %c0_15 = arith.constant 0 : index
    %c0_16 = arith.constant 0 : index
    %28 = vector.load %arg3[%c0_14, %c0_15, %c0_16] : memref<2x32x128xf32, #tpu.memory_space<vmem>>, vector<1x32x96xf32>
    %29 = vector.shape_cast %28 : vector<1x32x96xf32> to vector<32x96xf32>
    %c0_17 = arith.constant 0 : index
    %c0_18 = arith.constant 0 : index
    %c96 = arith.constant 96 : index
    %30 = vector.load %arg3[%c0_17, %c0_18, %c96] : memref<2x32x128xf32, #tpu.memory_space<vmem>>, vector<1x32x32xf32>
    %31 = vector.shape_cast %30 : vector<1x32x32xf32> to vector<32x32xf32>
    %c1_19 = arith.constant 1 : index
    %c0_20 = arith.constant 0 : index
    %c0_21 = arith.constant 0 : index
    %32 = vector.load %arg5[%c1_19, %c0_20, %c0_21] : memref<3x8x128xf32, #tpu.memory_space<vmem>>, vector<1x1x96xf32>
    %33 = vector.shape_cast %32 : vector<1x1x96xf32> to vector<1x96xf32>
    %cst_22 = arith.constant dense<0.000000e+00> : vector<8x96xf32>
    %34 = tpu.matmul %27, %29, %cst_22 {dimension_numbers = #tpu.dot_dimension_numbers<[1], [0], [0], [1], [0, 0, 1, 1], [], []>} : vector<8x32xf32>, vector<32x96xf32>, vector<8x96xf32> -> vector<8x96xf32>
    %35 = vector.broadcast %33 : vector<1x96xf32> to vector<8x96xf32>
    %36 = arith.addf %34, %35 : vector<8x96xf32>
    %37 = vector.extract_strided_slice %36 {offsets = [0, 0], sizes = [8, 16], strides = [1, 1]} : vector<8x96xf32> to vector<8x16xf32>
    %38 = vector.extract_strided_slice %36 {offsets = [0, 32], sizes = [8, 16], strides = [1, 1]} : vector<8x96xf32> to vector<8x16xf32>
    %39 = vector.extract_strided_slice %36 {offsets = [0, 64], sizes = [8, 16], strides = [1, 1]} : vector<8x96xf32> to vector<8x16xf32>
    %cst_23 = arith.constant dense<0.000000e+00> : vector<8x8xf32>
    %40 = tpu.matmul %37, %38, %cst_23 {dimension_numbers = #tpu.dot_dimension_numbers<[1], [1], [0], [0], [0, 0, 1, 0], [], []>} : vector<8x16xf32>, vector<8x16xf32>, vector<8x8xf32> -> vector<8x8xf32>
    %cst_24 = arith.constant 2.500000e-01 : f32
    %41 = vector.broadcast %cst_24 : f32 to vector<8x8xf32>
    %42 = arith.mulf %40, %41 : vector<8x8xf32>
    %43 = vector.broadcast %3 : vector<1x8xf32> to vector<8x8xf32>
    %44 = arith.addf %42, %43 : vector<8x8xf32>
    %cst_25 = arith.constant dense<0xFF800000> : vector<8xf32>
    %45 = vector.multi_reduction <maximumf>, %44, %cst_25 [1] : vector<8x8xf32> to vector<8xf32>
    %46 = vector.shape_cast %45 : vector<8xf32> to vector<8x1xf32>
    %47 = vector.broadcast %46 : vector<8x1xf32> to vector<8x8xf32>
    %48 = arith.subf %44, %47 : vector<8x8xf32>
    %49 = math.exp %48 : vector<8x8xf32>
    %cst_26 = arith.constant dense<0.000000e+00> : vector<8xf32>
    %50 = vector.multi_reduction <add>, %49, %cst_26 [1] : vector<8x8xf32> to vector<8xf32>
    %51 = vector.shape_cast %50 : vector<8xf32> to vector<8x1xf32>
    %52 = tpu.reciprocal %51 {approx = true} : vector<8x1xf32> -> vector<8x1xf32>
    %53 = vector.broadcast %52 : vector<8x1xf32> to vector<8x8xf32>
    %54 = arith.mulf %49, %53 : vector<8x8xf32>
    %cst_27 = arith.constant dense<0.000000e+00> : vector<8x16xf32>
    %55 = tpu.matmul %54, %39, %cst_27 {dimension_numbers = #tpu.dot_dimension_numbers<[1], [0], [0], [1], [0, 0, 1, 1], [], []>} : vector<8x8xf32>, vector<8x16xf32>, vector<8x16xf32> -> vector<8x16xf32>
    %56 = vector.extract_strided_slice %36 {offsets = [0, 16], sizes = [8, 16], strides = [1, 1]} : vector<8x96xf32> to vector<8x16xf32>
    %57 = vector.extract_strided_slice %36 {offsets = [0, 48], sizes = [8, 16], strides = [1, 1]} : vector<8x96xf32> to vector<8x16xf32>
    %58 = vector.extract_strided_slice %36 {offsets = [0, 80], sizes = [8, 16], strides = [1, 1]} : vector<8x96xf32> to vector<8x16xf32>
    %cst_28 = arith.constant dense<0.000000e+00> : vector<8x8xf32>
    %59 = tpu.matmul %56, %57, %cst_28 {dimension_numbers = #tpu.dot_dimension_numbers<[1], [1], [0], [0], [0, 0, 1, 0], [], []>} : vector<8x16xf32>, vector<8x16xf32>, vector<8x8xf32> -> vector<8x8xf32>
    %cst_29 = arith.constant 2.500000e-01 : f32
    %60 = vector.broadcast %cst_29 : f32 to vector<8x8xf32>
    %61 = arith.mulf %59, %60 : vector<8x8xf32>
    %62 = vector.broadcast %3 : vector<1x8xf32> to vector<8x8xf32>
    %63 = arith.addf %61, %62 : vector<8x8xf32>
    %cst_30 = arith.constant dense<0xFF800000> : vector<8xf32>
    %64 = vector.multi_reduction <maximumf>, %63, %cst_30 [1] : vector<8x8xf32> to vector<8xf32>
    %65 = vector.shape_cast %64 : vector<8xf32> to vector<8x1xf32>
    %66 = vector.broadcast %65 : vector<8x1xf32> to vector<8x8xf32>
    %67 = arith.subf %63, %66 : vector<8x8xf32>
    %68 = math.exp %67 : vector<8x8xf32>
    %cst_31 = arith.constant dense<0.000000e+00> : vector<8xf32>
    %69 = vector.multi_reduction <add>, %68, %cst_31 [1] : vector<8x8xf32> to vector<8xf32>
    %70 = vector.shape_cast %69 : vector<8xf32> to vector<8x1xf32>
    %71 = tpu.reciprocal %70 {approx = true} : vector<8x1xf32> -> vector<8x1xf32>
    %72 = vector.broadcast %71 : vector<8x1xf32> to vector<8x8xf32>
    %73 = arith.mulf %68, %72 : vector<8x8xf32>
    %cst_32 = arith.constant dense<0.000000e+00> : vector<8x16xf32>
    %74 = tpu.matmul %73, %58, %cst_32 {dimension_numbers = #tpu.dot_dimension_numbers<[1], [0], [0], [1], [0, 0, 1, 1], [], []>} : vector<8x8xf32>, vector<8x16xf32>, vector<8x16xf32> -> vector<8x16xf32>
    %75 = tpu.concatenate %55, %74 in 1 : vector<8x16xf32>, vector<8x16xf32> -> vector<8x32xf32>
    %cst_33 = arith.constant dense<0.000000e+00> : vector<8x32xf32>
    %76 = tpu.matmul %75, %31, %cst_33 {dimension_numbers = #tpu.dot_dimension_numbers<[1], [0], [0], [1], [0, 0, 1, 1], [], []>} : vector<8x32xf32>, vector<32x32xf32>, vector<8x32xf32> -> vector<8x32xf32>
    %c1_34 = arith.constant 1 : index
    %c1_35 = arith.constant 1 : index
    %c0_36 = arith.constant 0 : index
    %77 = vector.load %arg5[%c1_34, %c1_35, %c0_36] : memref<3x8x128xf32, #tpu.memory_space<vmem>>, vector<1x1x32xf32>
    %78 = vector.shape_cast %77 : vector<1x1x32xf32> to vector<1x32xf32>
    %79 = vector.broadcast %78 : vector<1x32xf32> to vector<8x32xf32>
    %80 = arith.addf %76, %79 : vector<8x32xf32>
    %81 = arith.addf %80, %27 : vector<8x32xf32>
    %c1_37 = arith.constant 1 : index
    %c2 = arith.constant 2 : index
    %c0_38 = arith.constant 0 : index
    %82 = vector.load %arg5[%c1_37, %c2, %c0_38] : memref<3x8x128xf32, #tpu.memory_space<vmem>>, vector<1x1x32xf32>
    %83 = vector.shape_cast %82 : vector<1x1x32xf32> to vector<1x32xf32>
    %c1_39 = arith.constant 1 : index
    %c3 = arith.constant 3 : index
    %c0_40 = arith.constant 0 : index
    %84 = vector.load %arg5[%c1_39, %c3, %c0_40] : memref<3x8x128xf32, #tpu.memory_space<vmem>>, vector<1x1x32xf32>
    %85 = vector.shape_cast %84 : vector<1x1x32xf32> to vector<1x32xf32>
    %cst_41 = arith.constant dense<0.000000e+00> : vector<8xf32>
    %86 = vector.multi_reduction <add>, %81, %cst_41 [1] : vector<8x32xf32> to vector<8xf32>
    %87 = vector.shape_cast %86 : vector<8xf32> to vector<8x1xf32>
    %cst_42 = arith.constant 3.200000e+01 : f32
    %88 = vector.broadcast %cst_42 : f32 to vector<8x1xf32>
    %89 = arith.divf %87, %88 : vector<8x1xf32>
    %90 = vector.broadcast %89 : vector<8x1xf32> to vector<8x32xf32>
    %91 = arith.subf %81, %90 : vector<8x32xf32>
    %92 = arith.mulf %91, %91 : vector<8x32xf32>
    %cst_43 = arith.constant dense<0.000000e+00> : vector<8xf32>
    %93 = vector.multi_reduction <add>, %92, %cst_43 [1] : vector<8x32xf32> to vector<8xf32>
    %94 = vector.shape_cast %93 : vector<8xf32> to vector<8x1xf32>
    %cst_44 = arith.constant 3.200000e+01 : f32
    %95 = vector.broadcast %cst_44 : f32 to vector<8x1xf32>
    %96 = arith.divf %94, %95 : vector<8x1xf32>
    %cst_45 = arith.constant 9.99999996E-13 : f32
    %97 = vector.broadcast %cst_45 : f32 to vector<8x1xf32>
    %98 = arith.addf %96, %97 : vector<8x1xf32>
    %99 = math.rsqrt %98 : vector<8x1xf32>
    %100 = vector.broadcast %99 : vector<8x1xf32> to vector<8x32xf32>
    %101 = arith.mulf %91, %100 : vector<8x32xf32>
    %102 = vector.broadcast %83 : vector<1x32xf32> to vector<8x32xf32>
    %103 = arith.mulf %101, %102 : vector<8x32xf32>
    %104 = vector.broadcast %85 : vector<1x32xf32> to vector<8x32xf32>
    %105 = arith.addf %103, %104 : vector<8x32xf32>
    %c0_46 = arith.constant 0 : index
    %c0_47 = arith.constant 0 : index
    %c0_48 = arith.constant 0 : index
    %106 = vector.load %arg4[%c0_46, %c0_47, %c0_48] : memref<2x96x64xf32, #tpu.memory_space<vmem>>, vector<1x32x64xf32>
    %107 = vector.shape_cast %106 : vector<1x32x64xf32> to vector<32x64xf32>
    %c0_49 = arith.constant 0 : index
    %c32 = arith.constant 32 : index
    %c0_50 = arith.constant 0 : index
    %108 = vector.load %arg4[%c0_49, %c32, %c0_50] : memref<2x96x64xf32, #tpu.memory_space<vmem>>, vector<1x64x32xf32>
    %109 = vector.shape_cast %108 : vector<1x64x32xf32> to vector<64x32xf32>
    %cst_51 = arith.constant dense<0.000000e+00> : vector<8x64xf32>
    %110 = tpu.matmul %105, %107, %cst_51 {dimension_numbers = #tpu.dot_dimension_numbers<[1], [0], [0], [1], [0, 0, 1, 1], [], []>} : vector<8x32xf32>, vector<32x64xf32>, vector<8x64xf32> -> vector<8x64xf32>
    %c1_52 = arith.constant 1 : index
    %c4 = arith.constant 4 : index
    %c0_53 = arith.constant 0 : index
    %111 = vector.load %arg5[%c1_52, %c4, %c0_53] : memref<3x8x128xf32, #tpu.memory_space<vmem>>, vector<1x1x64xf32>
    %112 = vector.shape_cast %111 : vector<1x1x64xf32> to vector<1x64xf32>
    %113 = vector.broadcast %112 : vector<1x64xf32> to vector<8x64xf32>
    %114 = arith.addf %110, %113 : vector<8x64xf32>
    %cst_54 = arith.constant 5.000000e-01 : f32
    %115 = vector.broadcast %cst_54 : f32 to vector<8x64xf32>
    %116 = arith.mulf %115, %114 : vector<8x64xf32>
    %cst_55 = arith.constant 4.471500e-02 : f32
    %117 = vector.broadcast %cst_55 : f32 to vector<8x64xf32>
    %118 = arith.mulf %117, %114 : vector<8x64xf32>
    %119 = arith.mulf %118, %114 : vector<8x64xf32>
    %120 = arith.mulf %119, %114 : vector<8x64xf32>
    %121 = arith.addf %114, %120 : vector<8x64xf32>
    %cst_56 = arith.constant 0.797884583 : f32
    %122 = vector.broadcast %cst_56 : f32 to vector<8x64xf32>
    %123 = arith.mulf %122, %121 : vector<8x64xf32>
    %124 = math.tanh %123 : vector<8x64xf32>
    %cst_57 = arith.constant 1.000000e+00 : f32
    %125 = vector.broadcast %cst_57 : f32 to vector<8x64xf32>
    %126 = arith.addf %125, %124 : vector<8x64xf32>
    %127 = arith.mulf %116, %126 : vector<8x64xf32>
    %cst_58 = arith.constant dense<0.000000e+00> : vector<8x32xf32>
    %128 = tpu.matmul %127, %109, %cst_58 {dimension_numbers = #tpu.dot_dimension_numbers<[1], [0], [0], [1], [0, 0, 1, 1], [], []>} : vector<8x64xf32>, vector<64x32xf32>, vector<8x32xf32> -> vector<8x32xf32>
    %c1_59 = arith.constant 1 : index
    %c5 = arith.constant 5 : index
    %c0_60 = arith.constant 0 : index
    %129 = vector.load %arg5[%c1_59, %c5, %c0_60] : memref<3x8x128xf32, #tpu.memory_space<vmem>>, vector<1x1x32xf32>
    %130 = vector.shape_cast %129 : vector<1x1x32xf32> to vector<1x32xf32>
    %131 = vector.broadcast %130 : vector<1x32xf32> to vector<8x32xf32>
    %132 = arith.addf %128, %131 : vector<8x32xf32>
    %133 = arith.addf %132, %105 : vector<8x32xf32>
    %c1_61 = arith.constant 1 : index
    %c6 = arith.constant 6 : index
    %c0_62 = arith.constant 0 : index
    %134 = vector.load %arg5[%c1_61, %c6, %c0_62] : memref<3x8x128xf32, #tpu.memory_space<vmem>>, vector<1x1x32xf32>
    %135 = vector.shape_cast %134 : vector<1x1x32xf32> to vector<1x32xf32>
    %c1_63 = arith.constant 1 : index
    %c7 = arith.constant 7 : index
    %c0_64 = arith.constant 0 : index
    %136 = vector.load %arg5[%c1_63, %c7, %c0_64] : memref<3x8x128xf32, #tpu.memory_space<vmem>>, vector<1x1x32xf32>
    %137 = vector.shape_cast %136 : vector<1x1x32xf32> to vector<1x32xf32>
    %cst_65 = arith.constant dense<0.000000e+00> : vector<8xf32>
    %138 = vector.multi_reduction <add>, %133, %cst_65 [1] : vector<8x32xf32> to vector<8xf32>
    %139 = vector.shape_cast %138 : vector<8xf32> to vector<8x1xf32>
    %cst_66 = arith.constant 3.200000e+01 : f32
    %140 = vector.broadcast %cst_66 : f32 to vector<8x1xf32>
    %141 = arith.divf %139, %140 : vector<8x1xf32>
    %142 = vector.broadcast %141 : vector<8x1xf32> to vector<8x32xf32>
    %143 = arith.subf %133, %142 : vector<8x32xf32>
    %144 = arith.mulf %143, %143 : vector<8x32xf32>
    %cst_67 = arith.constant dense<0.000000e+00> : vector<8xf32>
    %145 = vector.multi_reduction <add>, %144, %cst_67 [1] : vector<8x32xf32> to vector<8xf32>
    %146 = vector.shape_cast %145 : vector<8xf32> to vector<8x1xf32>
    %cst_68 = arith.constant 3.200000e+01 : f32
    %147 = vector.broadcast %cst_68 : f32 to vector<8x1xf32>
    %148 = arith.divf %146, %147 : vector<8x1xf32>
    %cst_69 = arith.constant 9.99999996E-13 : f32
    %149 = vector.broadcast %cst_69 : f32 to vector<8x1xf32>
    %150 = arith.addf %148, %149 : vector<8x1xf32>
    %151 = math.rsqrt %150 : vector<8x1xf32>
    %152 = vector.broadcast %151 : vector<8x1xf32> to vector<8x32xf32>
    %153 = arith.mulf %143, %152 : vector<8x32xf32>
    %154 = vector.broadcast %135 : vector<1x32xf32> to vector<8x32xf32>
    %155 = arith.mulf %153, %154 : vector<8x32xf32>
    %156 = vector.broadcast %137 : vector<1x32xf32> to vector<8x32xf32>
    %157 = arith.addf %155, %156 : vector<8x32xf32>
    %c1_70 = arith.constant 1 : index
    %c0_71 = arith.constant 0 : index
    %c0_72 = arith.constant 0 : index
    %158 = vector.load %arg3[%c1_70, %c0_71, %c0_72] : memref<2x32x128xf32, #tpu.memory_space<vmem>>, vector<1x32x96xf32>
    %159 = vector.shape_cast %158 : vector<1x32x96xf32> to vector<32x96xf32>
    %c1_73 = arith.constant 1 : index
    %c0_74 = arith.constant 0 : index
    %c96_75 = arith.constant 96 : index
    %160 = vector.load %arg3[%c1_73, %c0_74, %c96_75] : memref<2x32x128xf32, #tpu.memory_space<vmem>>, vector<1x32x32xf32>
    %161 = vector.shape_cast %160 : vector<1x32x32xf32> to vector<32x32xf32>
    %c2_76 = arith.constant 2 : index
    %c0_77 = arith.constant 0 : index
    %c0_78 = arith.constant 0 : index
    %162 = vector.load %arg5[%c2_76, %c0_77, %c0_78] : memref<3x8x128xf32, #tpu.memory_space<vmem>>, vector<1x1x96xf32>
    %163 = vector.shape_cast %162 : vector<1x1x96xf32> to vector<1x96xf32>
    %cst_79 = arith.constant dense<0.000000e+00> : vector<8x96xf32>
    %164 = tpu.matmul %157, %159, %cst_79 {dimension_numbers = #tpu.dot_dimension_numbers<[1], [0], [0], [1], [0, 0, 1, 1], [], []>} : vector<8x32xf32>, vector<32x96xf32>, vector<8x96xf32> -> vector<8x96xf32>
    %165 = vector.broadcast %163 : vector<1x96xf32> to vector<8x96xf32>
    %166 = arith.addf %164, %165 : vector<8x96xf32>
    %167 = vector.extract_strided_slice %166 {offsets = [0, 0], sizes = [8, 16], strides = [1, 1]} : vector<8x96xf32> to vector<8x16xf32>
    %168 = vector.extract_strided_slice %166 {offsets = [0, 32], sizes = [8, 16], strides = [1, 1]} : vector<8x96xf32> to vector<8x16xf32>
    %169 = vector.extract_strided_slice %166 {offsets = [0, 64], sizes = [8, 16], strides = [1, 1]} : vector<8x96xf32> to vector<8x16xf32>
    %cst_80 = arith.constant dense<0.000000e+00> : vector<8x8xf32>
    %170 = tpu.matmul %167, %168, %cst_80 {dimension_numbers = #tpu.dot_dimension_numbers<[1], [1], [0], [0], [0, 0, 1, 0], [], []>} : vector<8x16xf32>, vector<8x16xf32>, vector<8x8xf32> -> vector<8x8xf32>
    %cst_81 = arith.constant 2.500000e-01 : f32
    %171 = vector.broadcast %cst_81 : f32 to vector<8x8xf32>
    %172 = arith.mulf %170, %171 : vector<8x8xf32>
    %173 = vector.broadcast %3 : vector<1x8xf32> to vector<8x8xf32>
    %174 = arith.addf %172, %173 : vector<8x8xf32>
    %cst_82 = arith.constant dense<0xFF800000> : vector<8xf32>
    %175 = vector.multi_reduction <maximumf>, %174, %cst_82 [1] : vector<8x8xf32> to vector<8xf32>
    %176 = vector.shape_cast %175 : vector<8xf32> to vector<8x1xf32>
    %177 = vector.broadcast %176 : vector<8x1xf32> to vector<8x8xf32>
    %178 = arith.subf %174, %177 : vector<8x8xf32>
    %179 = math.exp %178 : vector<8x8xf32>
    %cst_83 = arith.constant dense<0.000000e+00> : vector<8xf32>
    %180 = vector.multi_reduction <add>, %179, %cst_83 [1] : vector<8x8xf32> to vector<8xf32>
    %181 = vector.shape_cast %180 : vector<8xf32> to vector<8x1xf32>
    %182 = tpu.reciprocal %181 {approx = true} : vector<8x1xf32> -> vector<8x1xf32>
    %183 = vector.broadcast %182 : vector<8x1xf32> to vector<8x8xf32>
    %184 = arith.mulf %179, %183 : vector<8x8xf32>
    %cst_84 = arith.constant dense<0.000000e+00> : vector<8x16xf32>
    %185 = tpu.matmul %184, %169, %cst_84 {dimension_numbers = #tpu.dot_dimension_numbers<[1], [0], [0], [1], [0, 0, 1, 1], [], []>} : vector<8x8xf32>, vector<8x16xf32>, vector<8x16xf32> -> vector<8x16xf32>
    %186 = vector.extract_strided_slice %166 {offsets = [0, 16], sizes = [8, 16], strides = [1, 1]} : vector<8x96xf32> to vector<8x16xf32>
    %187 = vector.extract_strided_slice %166 {offsets = [0, 48], sizes = [8, 16], strides = [1, 1]} : vector<8x96xf32> to vector<8x16xf32>
    %188 = vector.extract_strided_slice %166 {offsets = [0, 80], sizes = [8, 16], strides = [1, 1]} : vector<8x96xf32> to vector<8x16xf32>
    %cst_85 = arith.constant dense<0.000000e+00> : vector<8x8xf32>
    %189 = tpu.matmul %186, %187, %cst_85 {dimension_numbers = #tpu.dot_dimension_numbers<[1], [1], [0], [0], [0, 0, 1, 0], [], []>} : vector<8x16xf32>, vector<8x16xf32>, vector<8x8xf32> -> vector<8x8xf32>
    %cst_86 = arith.constant 2.500000e-01 : f32
    %190 = vector.broadcast %cst_86 : f32 to vector<8x8xf32>
    %191 = arith.mulf %189, %190 : vector<8x8xf32>
    %192 = vector.broadcast %3 : vector<1x8xf32> to vector<8x8xf32>
    %193 = arith.addf %191, %192 : vector<8x8xf32>
    %cst_87 = arith.constant dense<0xFF800000> : vector<8xf32>
    %194 = vector.multi_reduction <maximumf>, %193, %cst_87 [1] : vector<8x8xf32> to vector<8xf32>
    %195 = vector.shape_cast %194 : vector<8xf32> to vector<8x1xf32>
    %196 = vector.broadcast %195 : vector<8x1xf32> to vector<8x8xf32>
    %197 = arith.subf %193, %196 : vector<8x8xf32>
    %198 = math.exp %197 : vector<8x8xf32>
    %cst_88 = arith.constant dense<0.000000e+00> : vector<8xf32>
    %199 = vector.multi_reduction <add>, %198, %cst_88 [1] : vector<8x8xf32> to vector<8xf32>
    %200 = vector.shape_cast %199 : vector<8xf32> to vector<8x1xf32>
    %201 = tpu.reciprocal %200 {approx = true} : vector<8x1xf32> -> vector<8x1xf32>
    %202 = vector.broadcast %201 : vector<8x1xf32> to vector<8x8xf32>
    %203 = arith.mulf %198, %202 : vector<8x8xf32>
    %cst_89 = arith.constant dense<0.000000e+00> : vector<8x16xf32>
    %204 = tpu.matmul %203, %188, %cst_89 {dimension_numbers = #tpu.dot_dimension_numbers<[1], [0], [0], [1], [0, 0, 1, 1], [], []>} : vector<8x8xf32>, vector<8x16xf32>, vector<8x16xf32> -> vector<8x16xf32>
    %205 = tpu.concatenate %185, %204 in 1 : vector<8x16xf32>, vector<8x16xf32> -> vector<8x32xf32>
    %cst_90 = arith.constant dense<0.000000e+00> : vector<8x32xf32>
    %206 = tpu.matmul %205, %161, %cst_90 {dimension_numbers = #tpu.dot_dimension_numbers<[1], [0], [0], [1], [0, 0, 1, 1], [], []>} : vector<8x32xf32>, vector<32x32xf32>, vector<8x32xf32> -> vector<8x32xf32>
    %c2_91 = arith.constant 2 : index
    %c1_92 = arith.constant 1 : index
    %c0_93 = arith.constant 0 : index
    %207 = vector.load %arg5[%c2_91, %c1_92, %c0_93] : memref<3x8x128xf32, #tpu.memory_space<vmem>>, vector<1x1x32xf32>
    %208 = vector.shape_cast %207 : vector<1x1x32xf32> to vector<1x32xf32>
    %209 = vector.broadcast %208 : vector<1x32xf32> to vector<8x32xf32>
    %210 = arith.addf %206, %209 : vector<8x32xf32>
    %211 = arith.addf %210, %157 : vector<8x32xf32>
    %c2_94 = arith.constant 2 : index
    %c2_95 = arith.constant 2 : index
    %c0_96 = arith.constant 0 : index
    %212 = vector.load %arg5[%c2_94, %c2_95, %c0_96] : memref<3x8x128xf32, #tpu.memory_space<vmem>>, vector<1x1x32xf32>
    %213 = vector.shape_cast %212 : vector<1x1x32xf32> to vector<1x32xf32>
    %c2_97 = arith.constant 2 : index
    %c3_98 = arith.constant 3 : index
    %c0_99 = arith.constant 0 : index
    %214 = vector.load %arg5[%c2_97, %c3_98, %c0_99] : memref<3x8x128xf32, #tpu.memory_space<vmem>>, vector<1x1x32xf32>
    %215 = vector.shape_cast %214 : vector<1x1x32xf32> to vector<1x32xf32>
    %cst_100 = arith.constant dense<0.000000e+00> : vector<8xf32>
    %216 = vector.multi_reduction <add>, %211, %cst_100 [1] : vector<8x32xf32> to vector<8xf32>
    %217 = vector.shape_cast %216 : vector<8xf32> to vector<8x1xf32>
    %cst_101 = arith.constant 3.200000e+01 : f32
    %218 = vector.broadcast %cst_101 : f32 to vector<8x1xf32>
    %219 = arith.divf %217, %218 : vector<8x1xf32>
    %220 = vector.broadcast %219 : vector<8x1xf32> to vector<8x32xf32>
    %221 = arith.subf %211, %220 : vector<8x32xf32>
    %222 = arith.mulf %221, %221 : vector<8x32xf32>
    %cst_102 = arith.constant dense<0.000000e+00> : vector<8xf32>
    %223 = vector.multi_reduction <add>, %222, %cst_102 [1] : vector<8x32xf32> to vector<8xf32>
    %224 = vector.shape_cast %223 : vector<8xf32> to vector<8x1xf32>
    %cst_103 = arith.constant 3.200000e+01 : f32
    %225 = vector.broadcast %cst_103 : f32 to vector<8x1xf32>
    %226 = arith.divf %224, %225 : vector<8x1xf32>
    %cst_104 = arith.constant 9.99999996E-13 : f32
    %227 = vector.broadcast %cst_104 : f32 to vector<8x1xf32>
    %228 = arith.addf %226, %227 : vector<8x1xf32>
    %229 = math.rsqrt %228 : vector<8x1xf32>
    %230 = vector.broadcast %229 : vector<8x1xf32> to vector<8x32xf32>
    %231 = arith.mulf %221, %230 : vector<8x32xf32>
    %232 = vector.broadcast %213 : vector<1x32xf32> to vector<8x32xf32>
    %233 = arith.mulf %231, %232 : vector<8x32xf32>
    %234 = vector.broadcast %215 : vector<1x32xf32> to vector<8x32xf32>
    %235 = arith.addf %233, %234 : vector<8x32xf32>
    %c1_105 = arith.constant 1 : index
    %c0_106 = arith.constant 0 : index
    %c0_107 = arith.constant 0 : index
    %236 = vector.load %arg4[%c1_105, %c0_106, %c0_107] : memref<2x96x64xf32, #tpu.memory_space<vmem>>, vector<1x32x64xf32>
    %237 = vector.shape_cast %236 : vector<1x32x64xf32> to vector<32x64xf32>
    %c1_108 = arith.constant 1 : index
    %c32_109 = arith.constant 32 : index
    %c0_110 = arith.constant 0 : index
    %238 = vector.load %arg4[%c1_108, %c32_109, %c0_110] : memref<2x96x64xf32, #tpu.memory_space<vmem>>, vector<1x64x32xf32>
    %239 = vector.shape_cast %238 : vector<1x64x32xf32> to vector<64x32xf32>
    %cst_111 = arith.constant dense<0.000000e+00> : vector<8x64xf32>
    %240 = tpu.matmul %235, %237, %cst_111 {dimension_numbers = #tpu.dot_dimension_numbers<[1], [0], [0], [1], [0, 0, 1, 1], [], []>} : vector<8x32xf32>, vector<32x64xf32>, vector<8x64xf32> -> vector<8x64xf32>
    %c2_112 = arith.constant 2 : index
    %c4_113 = arith.constant 4 : index
    %c0_114 = arith.constant 0 : index
    %241 = vector.load %arg5[%c2_112, %c4_113, %c0_114] : memref<3x8x128xf32, #tpu.memory_space<vmem>>, vector<1x1x64xf32>
    %242 = vector.shape_cast %241 : vector<1x1x64xf32> to vector<1x64xf32>
    %243 = vector.broadcast %242 : vector<1x64xf32> to vector<8x64xf32>
    %244 = arith.addf %240, %243 : vector<8x64xf32>
    %cst_115 = arith.constant 5.000000e-01 : f32
    %245 = vector.broadcast %cst_115 : f32 to vector<8x64xf32>
    %246 = arith.mulf %245, %244 : vector<8x64xf32>
    %cst_116 = arith.constant 4.471500e-02 : f32
    %247 = vector.broadcast %cst_116 : f32 to vector<8x64xf32>
    %248 = arith.mulf %247, %244 : vector<8x64xf32>
    %249 = arith.mulf %248, %244 : vector<8x64xf32>
    %250 = arith.mulf %249, %244 : vector<8x64xf32>
    %251 = arith.addf %244, %250 : vector<8x64xf32>
    %cst_117 = arith.constant 0.797884583 : f32
    %252 = vector.broadcast %cst_117 : f32 to vector<8x64xf32>
    %253 = arith.mulf %252, %251 : vector<8x64xf32>
    %254 = math.tanh %253 : vector<8x64xf32>
    %cst_118 = arith.constant 1.000000e+00 : f32
    %255 = vector.broadcast %cst_118 : f32 to vector<8x64xf32>
    %256 = arith.addf %255, %254 : vector<8x64xf32>
    %257 = arith.mulf %246, %256 : vector<8x64xf32>
    %cst_119 = arith.constant dense<0.000000e+00> : vector<8x32xf32>
    %258 = tpu.matmul %257, %239, %cst_119 {dimension_numbers = #tpu.dot_dimension_numbers<[1], [0], [0], [1], [0, 0, 1, 1], [], []>} : vector<8x64xf32>, vector<64x32xf32>, vector<8x32xf32> -> vector<8x32xf32>
    %c2_120 = arith.constant 2 : index
    %c5_121 = arith.constant 5 : index
    %c0_122 = arith.constant 0 : index
    %259 = vector.load %arg5[%c2_120, %c5_121, %c0_122] : memref<3x8x128xf32, #tpu.memory_space<vmem>>, vector<1x1x32xf32>
    %260 = vector.shape_cast %259 : vector<1x1x32xf32> to vector<1x32xf32>
    %261 = vector.broadcast %260 : vector<1x32xf32> to vector<8x32xf32>
    %262 = arith.addf %258, %261 : vector<8x32xf32>
    %263 = arith.addf %262, %235 : vector<8x32xf32>
    %c2_123 = arith.constant 2 : index
    %c6_124 = arith.constant 6 : index
    %c0_125 = arith.constant 0 : index
    %264 = vector.load %arg5[%c2_123, %c6_124, %c0_125] : memref<3x8x128xf32, #tpu.memory_space<vmem>>, vector<1x1x32xf32>
    %265 = vector.shape_cast %264 : vector<1x1x32xf32> to vector<1x32xf32>
    %c2_126 = arith.constant 2 : index
    %c7_127 = arith.constant 7 : index
    %c0_128 = arith.constant 0 : index
    %266 = vector.load %arg5[%c2_126, %c7_127, %c0_128] : memref<3x8x128xf32, #tpu.memory_space<vmem>>, vector<1x1x32xf32>
    %267 = vector.shape_cast %266 : vector<1x1x32xf32> to vector<1x32xf32>
    %cst_129 = arith.constant dense<0.000000e+00> : vector<8xf32>
    %268 = vector.multi_reduction <add>, %263, %cst_129 [1] : vector<8x32xf32> to vector<8xf32>
    %269 = vector.shape_cast %268 : vector<8xf32> to vector<8x1xf32>
    %cst_130 = arith.constant 3.200000e+01 : f32
    %270 = vector.broadcast %cst_130 : f32 to vector<8x1xf32>
    %271 = arith.divf %269, %270 : vector<8x1xf32>
    %272 = vector.broadcast %271 : vector<8x1xf32> to vector<8x32xf32>
    %273 = arith.subf %263, %272 : vector<8x32xf32>
    %274 = arith.mulf %273, %273 : vector<8x32xf32>
    %cst_131 = arith.constant dense<0.000000e+00> : vector<8xf32>
    %275 = vector.multi_reduction <add>, %274, %cst_131 [1] : vector<8x32xf32> to vector<8xf32>
    %276 = vector.shape_cast %275 : vector<8xf32> to vector<8x1xf32>
    %cst_132 = arith.constant 3.200000e+01 : f32
    %277 = vector.broadcast %cst_132 : f32 to vector<8x1xf32>
    %278 = arith.divf %276, %277 : vector<8x1xf32>
    %cst_133 = arith.constant 9.99999996E-13 : f32
    %279 = vector.broadcast %cst_133 : f32 to vector<8x1xf32>
    %280 = arith.addf %278, %279 : vector<8x1xf32>
    %281 = math.rsqrt %280 : vector<8x1xf32>
    %282 = vector.broadcast %281 : vector<8x1xf32> to vector<8x32xf32>
    %283 = arith.mulf %273, %282 : vector<8x32xf32>
    %284 = vector.broadcast %265 : vector<1x32xf32> to vector<8x32xf32>
    %285 = arith.mulf %283, %284 : vector<8x32xf32>
    %286 = vector.broadcast %267 : vector<1x32xf32> to vector<8x32xf32>
    %287 = arith.addf %285, %286 : vector<8x32xf32>
    %288 = arith.addf %287, %157 : vector<8x32xf32>
    %cst_134 = arith.constant dense<0.000000e+00> : vector<32xf32>
    %289 = vector.multi_reduction <add>, %288, %cst_134 [0] : vector<8x32xf32> to vector<32xf32>
    %290 = vector.shape_cast %289 : vector<32xf32> to vector<1x32xf32>
    %cst_135 = arith.constant 8.000000e+00 : f32
    %291 = vector.broadcast %cst_135 : f32 to vector<1x32xf32>
    %292 = arith.divf %290, %291 : vector<1x32xf32>
    %c0_136 = arith.constant 0 : index
    %c0_137 = arith.constant 0 : index
    %c0_138 = arith.constant 0 : index
    %293 = vector.load %arg6[%c0_136, %c0_137, %c0_138] : memref<1x1x32xf32, #tpu.memory_space<vmem>>, vector<1x1x32xf32>
    %294 = vector.shape_cast %293 : vector<1x1x32xf32> to vector<1x32xf32>
    %295 = vector.shape_cast %292 : vector<1x32xf32> to vector<1x1x32xf32>
    tpu.vector_store %arg6[%c0_136, %c0_137, %c0_138], %295 {strides = array<i32>} : memref<1x1x32xf32, #tpu.memory_space<vmem>>, vector<1x1x32xf32>,
    return
  }
  func.func @transform_0(%arg0: i32) -> (i32, i32, i32) {
    %c0_i32 = arith.constant 0 : i32
    %c0_i32_0 = arith.constant 0 : i32
    %c0_i32_1 = arith.constant 0 : i32
    return %arg0, %c0_i32, %c0_i32_0 : i32, i32, i32
  }
  func.func @transform_1(%arg0: i32) -> (i32, i32, i32) {
    %c0_i32 = arith.constant 0 : i32
    %c0_i32_0 = arith.constant 0 : i32
    %c0_i32_1 = arith.constant 0 : i32
    return %arg0, %c0_i32, %c0_i32_0 : i32, i32, i32
  }
  func.func @transform_2(%arg0: i32) -> (i32, i32, i32) {
    %c0_i32 = arith.constant 0 : i32
    %c0_i32_0 = arith.constant 0 : i32
    %c0_i32_1 = arith.constant 0 : i32
    %c0_i32_2 = arith.constant 0 : i32
    return %c0_i32, %c0_i32_0, %c0_i32_1 : i32, i32, i32
  }
  func.func @transform_3(%arg0: i32) -> (i32, i32, i32) {
    %c0_i32 = arith.constant 0 : i32
    %c0_i32_0 = arith.constant 0 : i32
    %c0_i32_1 = arith.constant 0 : i32
    %c0_i32_2 = arith.constant 0 : i32
    return %c0_i32, %c0_i32_0, %c0_i32_1 : i32, i32, i32
  }
  func.func @transform_4(%arg0: i32) -> (i32, i32, i32) {
    %c0_i32 = arith.constant 0 : i32
    %c0_i32_0 = arith.constant 0 : i32
    %c0_i32_1 = arith.constant 0 : i32
    %c0_i32_2 = arith.constant 0 : i32
    return %c0_i32, %c0_i32_0, %c0_i32_1 : i32, i32, i32
  }
  func.func @transform_5(%arg0: i32) -> (i32, i32, i32) {
    %c0_i32 = arith.constant 0 : i32
    %c0_i32_0 = arith.constant 0 : i32
    %c0_i32_1 = arith.constant 0 : i32
    return %arg0, %c0_i32, %c0_i32_0 : i32, i32, i32
  }
}

</mosaic_0001>

<llo_original>
// kernel: model_forward.1
$region0: #{model_forward.1}
  #allocation0 [shape = 'u32[]', space=smem, size = 0x4, offset = 0x4, fixed_abs, tag = 'smem constant byte address 0x4 - core index']
  #allocation1 [shape = 'u32[144,128]{1,0:T(1,128)}', space=vmem, size = 0x12000, scoped, tag = 'internal scratch']
  %s0 = inlined_call_operand.vmem [shape: f32[2,8,32], index: 0, kind: input, shape index: {}]
  %s1 = inlined_call_operand.vmem [shape: f32[2,1,8], index: 1, kind: input, shape index: {}]
  %s2 = inlined_call_operand.vmem [shape: f32[2,32,128], index: 2, kind: input, shape index: {}]
  %s3 = inlined_call_operand.vmem [shape: f32[2,96,64], index: 3, kind: input, shape index: {}]
  %s4 = inlined_call_operand.vmem [shape: f32[3,8,128], index: 4, kind: input, shape index: {}]
  %s5 = inlined_call_operand.hbm [shape: f32[2,1,32], index: 5, kind: output, shape index: {}]
  %s6 = sld [smem:[#allocation0]]
  $region53: #{model_forward.1} parent=0
    _
  %s8 = ssub.s32 1, %s6
  %s9 = scalar_select 0, %s8, %s6
  $region1: #{model_forward.1} parent=0
    #allocation2 [shape = 'u8[1024]{0}', space=vmem, size = 0x400, scoped, tag = 'output window, operand 0']
    #allocation3 [shape = 's32[2]{0}', space=sflag, size = 0x8, scoped, tag = 'scoped memory for model_forward.1']
    %10 = vsyncpa [#allocation3], 0
    %s11 = scalar_lea.sflag [#allocation3], 1
    %12 = vsyncpa %s11, 0
    loop: start=0, step=1, limit=4
    $region2: #{model_forward.1} parent=1 // loop_pre_header
      _
    $region3: #{model_forward.1} parent=1 // loop_header
      %s14 = sphi 0, %s18
      %p15 = scmp.ge.s32.totalorder %s14, 4
      %s24 = sphi 0, %s26
      %s27 = sphi 0, %s24
      %s28 = sphi 0, %s27
      %s44 = sphi 0, %s28
      %s50 = sphi 0, %s52
      %s53 = sphi 0, %s50
      %s54 = sphi 0, %s53
      %s70 = sphi 0, %s54
      %s74 = sphi 0, %s74
      %s76 = sphi 0, %s74
      %s77 = sphi 0, %s76
      %s91 = sphi 0, %s77
      %s95 = sphi 0, %s95
      %s97 = sphi 0, %s95
      %s98 = sphi 0, %s97
      %s112 = sphi 0, %s98
      %s116 = sphi 0, %s116
      %s118 = sphi 0, %s116
      %s119 = sphi 0, %s118
      %s133 = sphi 0, %s119
      %s139 = sphi 0, %s141
      %s142 = sphi 0, %s139
      %s143 = sphi 0, %s142
      %s159 = sphi 0, %s143
    $region4: #{model_forward.1} parent=1 // loop_header_branch
      %17 = sbr.rel (%p15) target = $region8
    $region5: #{model_forward.1} parent=1 // loop_body
      %s19 = ssub.s32 %s14, 1
      %s20 = ssub.s32 %s14, 2
      %s21 = sadd.s32 %s14, 1
      %s22 = ssub.s32 %s14, %s21
      %p23 = scmp.eq.s32.totalorder %s22, 0
      %s25 = sadd.s32 %s24, 1
      %s26 = scalar_select %p23, %s24, %s25
      %p29 = pneg %p23
      %p30 = scmp.eq.s32.totalorder %s14, 1
      %p31 = por %p29, %p30
      %p32 = scmp.ne.s32.totalorder %s24, %s27
      %p33 = scmp.eq.s32.totalorder %s14, 0
      %p34 = por %p32, %p33
      %p35 = scmp.ne.s32.totalorder %s24, %s27
      %p36 = scmp.eq.s32.totalorder %s19, 1
      %p37 = por %p35, %p36
      %p38 = scmp.ne.s32.totalorder %s27, %s28
      %p39 = scmp.eq.s32.totalorder %s19, 0
      %p40 = por %p38, %p39
      %p41 = scmp.ne.s32.totalorder %s27, %s28
      %p42 = scmp.eq.s32.totalorder %s20, 1
      %p43 = por %p41, %p42
      %p45 = scmp.ne.s32.totalorder %s28, %s44
      %p46 = scmp.eq.s32.totalorder %s20, 0
      %p47 = por %p45, %p46
      %s48 = ssub.s32 %s14, %s21
      %p49 = scmp.eq.s32.totalorder %s48, 0
      %s51 = sadd.s32 %s50, 1
      %s52 = scalar_select %p49, %s50, %s51
      %p55 = pneg %p49
      %p56 = scmp.eq.s32.totalorder %s14, 1
      %p57 = por %p55, %p56
      %p58 = scmp.ne.s32.totalorder %s50, %s53
      %p59 = scmp.eq.s32.totalorder %s14, 0
      %p60 = por %p58, %p59
      %p61 = scmp.ne.s32.totalorder %s50, %s53
      %p62 = scmp.eq.s32.totalorder %s19, 1
      %p63 = por %p61, %p62
      %p64 = scmp.ne.s32.totalorder %s53, %s54
      %p65 = scmp.eq.s32.totalorder %s19, 0
      %p66 = por %p64, %p65
      %p67 = scmp.ne.s32.totalorder %s53, %s54
      %p68 = scmp.eq.s32.totalorder %s20, 1
      %p69 = por %p67, %p68
      %p71 = scmp.ne.s32.totalorder %s54, %s70
      %p72 = scmp.eq.s32.totalorder %s20, 0
      %p73 = por %p71, %p72
      %s75 = sadd.s32 %s74, 1
      %p78 = scmp.eq.s32.totalorder %s14, 1
      %p79 = scmp.ne.s32.totalorder %s74, %s76
      %p80 = scmp.eq.s32.totalorder %s14, 0
      %p81 = por %p79, %p80
      %p82 = scmp.ne.s32.totalorder %s74, %s76
      %p83 = scmp.eq.s32.totalorder %s19, 1
      %p84 = por %p82, %p83
      %p85 = scmp.ne.s32.totalorder %s76, %s77
      %p86 = scmp.eq.s32.totalorder %s19, 0
      %p87 = por %p85, %p86
      %p88 = scmp.ne.s32.totalorder %s76, %s77
      %p89 = scmp.eq.s32.totalorder %s20, 1
      %p90 = por %p88, %p89
      %p92 = scmp.ne.s32.totalorder %s77, %s91
      %p93 = scmp.eq.s32.totalorder %s20, 0
      %p94 = por %p92, %p93
      %s96 = sadd.s32 %s95, 1
      %p99 = scmp.eq.s32.totalorder %s14, 1
      %p100 = scmp.ne.s32.totalorder %s95, %s97
      %p101 = scmp.eq.s32.totalorder %s14, 0
      %p102 = por %p100, %p101
      %p103 = scmp.ne.s32.totalorder %s95, %s97
      %p104 = scmp.eq.s32.totalorder %s19, 1
      %p105 = por %p103, %p104
      %p106 = scmp.ne.s32.totalorder %s97, %s98
      %p107 = scmp.eq.s32.totalorder %s19, 0
      %p108 = por %p106, %p107
      %p109 = scmp.ne.s32.totalorder %s97, %s98
      %p110 = scmp.eq.s32.totalorder %s20, 1
      %p111 = por %p109, %p110
      %p113 = scmp.ne.s32.totalorder %s98, %s112
      %p114 = scmp.eq.s32.totalorder %s20, 0
      %p115 = por %p113, %p114
      %s117 = sadd.s32 %s116, 1
      %p120 = scmp.eq.s32.totalorder %s14, 1
      %p121 = scmp.ne.s32.totalorder %s116, %s118
      %p122 = scmp.eq.s32.totalorder %s14, 0
      %p123 = por %p121, %p122
      %p124 = scmp.ne.s32.totalorder %s116, %s118
      %p125 = scmp.eq.s32.totalorder %s19, 1
      %p126 = por %p124, %p125
      %p127 = scmp.ne.s32.totalorder %s118, %s119
      %p128 = scmp.eq.s32.totalorder %s19, 0
      %p129 = por %p127, %p128
      %p130 = scmp.ne.s32.totalorder %s118, %s119
      %p131 = scmp.eq.s32.totalorder %s20, 1
      %p132 = por %p130, %p131
      %p134 = scmp.ne.s32.totalorder %s119, %s133
      %p135 = scmp.eq.s32.totalorder %s20, 0
      %p136 = por %p134, %p135
      %s137 = ssub.s32 %s14, %s21
      %p138 = scmp.eq.s32.totalorder %s137, 0
      %s140 = sadd.s32 %s139, 1
      %s141 = scalar_select %p138, %s139, %s140
      %p144 = pneg %p138
      %p145 = scmp.eq.s32.totalorder %s14, 1
      %p146 = por %p144, %p145
      %p147 = scmp.ne.s32.totalorder %s139, %s142
      %p148 = scmp.eq.s32.totalorder %s14, 0
      %p149 = por %p147, %p148
      %p150 = scmp.ne.s32.totalorder %s139, %s142
      %p151 = scmp.eq.s32.totalorder %s19, 1
      %p152 = por %p150, %p151
      %p153 = scmp.ne.s32.totalorder %s142, %s143
      %p154 = scmp.eq.s32.totalorder %s19, 0
      %p155 = por %p153, %p154
      %p156 = scmp.ne.s32.totalorder %s142, %s143
      %p157 = scmp.eq.s32.totalorder %s20, 1
      %p158 = por %p156, %p157
      %p160 = scmp.ne.s32.totalorder %s143, %s159
      %p161 = scmp.eq.s32.totalorder %s20, 0
      %p162 = por %p160, %p161
      %p163 = scmp.le.s32.totalorder 1, %s14
      %p164 = scmp.lt.s32.totalorder %s14, 3
      %p165 = pnand %p163, %p164
      %p166 = pneg %p165
      // Predicated region
      $region9: #{model_forward.1} parent=5 // pred_check
        _
      $region10: #{model_forward.1} parent=5 // pred_check_branch
        %168 = sbr.rel (%p165) target = $region12
      $region11: #{model_forward.1} parent=5 // pred_region
        %s169 = ssub.s32 %s14, 1
        // Predicated region
        $region13: #{model_forward.1} parent=11 // pred_check
          %p170 = pneg %p87
        $region14: #{model_forward.1} parent=11 // pred_check_branch
          %172 = sbr.rel (%p170) target = $region16
        $region15: #{model_forward.1} parent=11 // pred_region
          _
        $region16: #{model_forward.1} parent=11 // pred_fallthru
          _
        // Predicated region
        $region17: #{model_forward.1} parent=11 // pred_check
          %p173 = pneg %p108
        $region18: #{model_forward.1} parent=11 // pred_check_branch
          %175 = sbr.rel (%p173) target = $region20
        $region19: #{model_forward.1} parent=11 // pred_region
          _
        $region20: #{model_forward.1} parent=11 // pred_fallthru
          _
        // Predicated region
        $region21: #{model_forward.1} parent=11 // pred_check
          %p176 = pneg %p129
        $region22: #{model_forward.1} parent=11 // pred_check_branch
          %178 = sbr.rel (%p176) target = $region24
        $region23: #{model_forward.1} parent=11 // pred_region
          _
        $region24: #{model_forward.1} parent=11 // pred_fallthru
          _
      $region12: #{model_forward.1} parent=5 // pred_fallthru
        _
      %p179 = scmp.lt.s32.totalorder %s14, 2
      // Predicated region
      $region25: #{model_forward.1} parent=5 // pred_check
        %p180 = pneg %p179
      $region26: #{model_forward.1} parent=5 // pred_check_branch
        %182 = sbr.rel (%p180) target = $region28
      $region27: #{model_forward.1} parent=5 // pred_region
        // Predicated region
        $region29: #{model_forward.1} parent=27 // pred_check
          %p183 = pneg %p34
        $region30: #{model_forward.1} parent=27 // pred_check_branch
          %185 = sbr.rel (%p183) target = $region32
        $region31: #{model_forward.1} parent=27 // pred_region
          %p186 = scmp.lt.s32.totalorder %s14, 1
          %s187 = scalar_select %p186, %s14, 1
          %s188 = smul.addr %s187, 8
          %s189 = scalar_lea.vmem %s0, %s188
        $region32: #{model_forward.1} parent=27 // pred_fallthru
          _
        // Predicated region
        $region33: #{model_forward.1} parent=27 // pred_check
          %p190 = pneg %p60
        $region34: #{model_forward.1} parent=27 // pred_check_branch
          %192 = sbr.rel (%p190) target = $region36
        $region35: #{model_forward.1} parent=27 // pred_region
          %p193 = scmp.lt.s32.totalorder %s14, 1
          %s194 = scalar_select %p193, %s14, 1
          %s195 = scalar_lea.vmem %s1, %s194
        $region36: #{model_forward.1} parent=27 // pred_fallthru
          _
      $region28: #{model_forward.1} parent=5 // pred_fallthru
        _
      %p196 = scmp.le.s32.totalorder 1, %s14
      %p197 = scmp.lt.s32.totalorder %s14, 3
      %p198 = pnand %p196, %p197
      %p199 = pneg %p198
      // Predicated region
      $region37: #{model_forward.1} parent=5 // pred_check
        _
      $region38: #{model_forward.1} parent=5 // pred_check_branch
        %201 = sbr.rel (%p198) target = $region40
      $region39: #{model_forward.1} parent=5 // pred_region
        %s202 = ssub.s32 %s14, 1
        %p203 = scmp.lt.s32.totalorder %s19, 1
        %s204 = scalar_select %p203, %s19, 1
        %s205 = smul.addr %s204, 8
        %s206 = scalar_lea.vmem %s0, %s205
        %p207 = pneg %p40
        %p208 = pneg %p37
        %p209 = scmp.lt.s32.totalorder %s19, 1
        %s210 = scalar_select %p209, %s19, 1
        %s211 = scalar_lea.vmem %s1, %s210
        %p212 = pneg %p66
        %p213 = pneg %p63
        %p214 = pneg %p87
        %p215 = pneg %p84
        %p216 = pneg %p108
        %p217 = pneg %p105
        %p218 = pneg %p129
        %p219 = pneg %p126
        %p220 = pneg %p155
        %p221 = pneg %p152
        %s222 = sand.u32 %s142, 1
        %s223 = scalar_lea.sflag [#allocation3], %s222
        %s224 = sand.u32 %s142, 1
        %s225 = scalar_lea.vmem [#allocation2], %s224
        %p226 = scmp.lt.s32.totalorder %s19, 1
        %s227 = scalar_select %p226, %s19, 1
        %s228 = smul.addr %s227, 8
        %s229 = scalar_lea.vmem %s0, %s228
        %p230 = scmp.lt.s32.totalorder %s19, 1
        %s231 = scalar_select %p230, %s19, 1
        %s232 = scalar_lea.vmem %s1, %s231
        %v233 = vld [vmem:[%s229] sm:$0xff]
        %v234 = vld [vmem:[%s232] sm:$0x1]
        %v235 = vld [vmem:[%s4] sm:$0x1]
        %v236 = vld [vmem:[%s4 + $0x1] sm:$0x1]
        %vm237 = vcmask 261120
        %v238 = vsel %vm237, %v233, 0.0
        %239 = vadd.xlane.f32.xlu0 %v238
        %v240 = vpop.xlane.xlu0 %239
        %v241 = vrcp.pop 32.0
        %v242 = vmul.f32 %v240, %v241
        %v243 = vsub.f32 %v233, %v242
        %v244 = vmul.f32 %v243, %v243
        %v245 = vsel %vm237, %v244, 0.0
        %246 = vadd.xlane.f32.xlu0 %v245
        %v247 = vpop.xlane.xlu0 %246
        %v248 = vmul.f32 %v247, %v241
        %v249 = vadd.f32 %v248, 1e-12
        %v250 = vrsqrt.pop %v249
        %v251 = vmul.f32 %v243, %v250
        %v252 = vlaneseq
        %v253 = vshrl.u32 %v252, 7
        %v254 = vsub.s32 0, %v253
        %v255 = vrot.slane %v235, %v254
        %v256 = vmul.f32 %v251, %v255
        %v257 = vlaneseq
        %v258 = vshrl.u32 %v257, 7
        %v259 = vsub.s32 0, %v258
        %v260 = vrot.slane %v236, %v259
        %v261 = vadd.f32 %v256, %v260
        %v262 = vld [vmem:[%s2] sm:$0xff]
        %v263 = vld [vmem:[%s2 + $0x8] sm:$0xff]
        %v264 = vld [vmem:[%s2 + $0x10] sm:$0xff]
        %v265 = vld [vmem:[%s2 + $0x18] sm:$0xff]
        %s266 = scalar_lea.vmem %s4, 8
        %v267 = vld [vmem:[%s266] sm:$0x1]
        %v268 = vlaneseq
        %v269 = vshrl.u32 %v268, 7
        %v270 = vsub.s32 0, %v269
        %v271 = vrot.slane %v267, %v270
        %v273 = vsel %vm237, %v261, 0
        %275 = vmatprep.subr.mxu0 0.0
        %276 = vmatpush1.msra.mxu0 %v262
        %277 = vmatprep.subr.mxu0 0.0
        %278 = vmatpush1.msra.mxu0 %v263
        %279 = vmatprep.subr.mxu0 0.0
        %280 = vmatpush1.msra.mxu0 %v264
        %281 = vmatprep.subr.mxu0 0.0
        %282 = vmatpush1.msra.mxu0 %v265
        %283 = vmatprep.subr.mxu0 0.0
        %284 = vmatpush1.msra.mxu0 0.0
        %285 = vmatprep.subr.mxu0 0.0
        %286 = vmatpush1.msra.mxu0 0.0
        %287 = vmatprep.subr.mxu0 0.0
        %288 = vmatpush1.msra.mxu0 0.0
        %289 = vmatprep.subr.mxu0 0.0
        %290 = vmatpush1.msra.mxu0 0.0
        %291 = vmatprep.subr.mxu0 0.0
        %292 = vmatpush1.msra.mxu0 0.0
        %293 = vmatprep.subr.mxu0 0.0
        %294 = vmatpush1.msra.mxu0 0.0
        %295 = vmatprep.subr.mxu0 0.0
        %296 = vmatpush1.msra.mxu0 0.0
        %297 = vmatprep.subr.mxu0 0.0
        %298 = vmatpush1.msra.mxu0 0.0
        %299 = vmatprep.subr.mxu0 0.0
        %300 = vmatpush1.msra.mxu0 0.0
        %301 = vmatprep.subr.mxu0 0.0
        %302 = vmatpush1.msra.mxu0 0.0
        %303 = vmatprep.subr.mxu0 0.0
        %304 = vmatpush1.msra.mxu0 0.0
        %305 = vmatprep.subr.mxu0 0.0
        %306 = vmatpush1.msra.mxu0 0.0
        %307 = vmatprep.subr.mxu0 0.0
        %308 = vmatpush1.msra.mxu0 0.0
        %309 = vmatprep.subr.mxu0 0.0
        %310 = vmatpush1.msra.mxu0 0.0
        %311 = vmatprep.subr.mxu0 0.0
        %312 = vmatpush1.msra.mxu0 0.0
        %313 = vmatprep.subr.mxu0 0.0
        %314 = vmatpush1.msra.mxu0 0.0
        %315 = vmatprep.subr.mxu0 0.0
        %316 = vmatpush1.msra.mxu0 0.0
        %317 = vmatprep.subr.mxu0 0.0
        %318 = vmatpush1.msra.mxu0 0.0
        %319 = vmatprep.subr.mxu0 0.0
        %320 = vmatpush1.msra.mxu0 0.0
        %321 = vmatprep.subr.mxu0 0.0
        %322 = vmatpush1.msra.mxu0 0.0
        %323 = vmatprep.subr.mxu0 0.0
        %324 = vmatpush1.msra.mxu0 0.0
        %325 = vmatprep.subr.mxu0 0.0
        %326 = vmatpush1.msra.mxu0 0.0
        %327 = vmatprep.subr.mxu0 0.0
        %328 = vmatpush1.msra.mxu0 0.0
        %329 = vmatprep.subr.mxu0 0.0
        %330 = vmatpush1.msra.mxu0 0.0
        %331 = vmatprep.subr.mxu0 0.0
        %332 = vmatpush1.msra.mxu0 0.0
        %333 = vmatprep.subr.mxu0 0.0
        %334 = vmatpush1.msra.mxu0 0.0
        %335 = vmatprep.subr.mxu0 0.0
        %336 = vmatpush1.msra.mxu0 0.0
        %337 = vmatprep.subr.mxu0 0.0
        %338 = vmatpush1.msra.mxu0 0.0
        %339 = vmatprep.mubr.f32.mxu0 0.0
        %340 = vmatmul.mubr.f32.gmra.mrb[0].mxu0 %v273
        %v341 = vpop.f32.mrb[0].mxu0
        %v342 = vadd.f32 %v271, %v341
        %v343 = vpop.f32.mrb[0].mxu0
        %344 = vdwg.mxu0
        %346 = vrot.lane.b32.xlu0 %v342, 96
        %v347 = vpop.permute.xlu0 %346
        %vm348 = vcmask 130048
        %v349 = vsel %vm348, %v342, 0
        %v351 = vsel %vm348, %v347, 0
        %353 = vmatprep.subr.mxu0 0.0
        %354 = vmatpush1.xpose.msra.mxu0 %v351
        %355 = vmatprep.subr.mxu0 0.0
        %356 = vmatpush1.xpose.msra.mxu0 0.0
        %357 = vmatprep.subr.mxu0 0.0
        %358 = vmatpush1.xpose.msra.mxu0 0.0
        %359 = vmatprep.subr.mxu0 0.0
        %360 = vmatpush1.xpose.msra.mxu0 0.0
        %361 = vmatprep.subr.mxu0 0.0
        %362 = vmatpush1.xpose.msra.mxu0 0.0
        %363 = vmatprep.subr.mxu0 0.0
        %364 = vmatpush1.xpose.msra.mxu0 0.0
        %365 = vmatprep.subr.mxu0 0.0
        %366 = vmatpush1.xpose.msra.mxu0 0.0
        %367 = vmatprep.subr.mxu0 0.0
        %368 = vmatpush1.xpose.msra.mxu0 0.0
        %369 = vmatprep.subr.mxu0 0.0
        %370 = vmatpush1.xpose.msra.mxu0 0.0
        %371 = vmatprep.subr.mxu0 0.0
        %372 = vmatpush1.xpose.msra.mxu0 0.0
        %373 = vmatprep.subr.mxu0 0.0
        %374 = vmatpush1.xpose.msra.mxu0 0.0
        %375 = vmatprep.subr.mxu0 0.0
        %376 = vmatpush1.xpose.msra.mxu0 0.0
        %377 = vmatprep.subr.mxu0 0.0
        %378 = vmatpush1.xpose.msra.mxu0 0.0
        %379 = vmatprep.subr.mxu0 0.0
        %380 = vmatpush1.xpose.msra.mxu0 0.0
        %381 = vmatprep.subr.mxu0 0.0
        %382 = vmatpush1.xpose.msra.mxu0 0.0
        %383 = vmatprep.subr.mxu0 0.0
        %384 = vmatpush1.xpose.msra.mxu0 0.0
        %385 = vmatprep.subr.mxu0 0.0
        %386 = vmatpush1.xpose.msra.mxu0 0.0
        %387 = vmatprep.subr.mxu0 0.0
        %388 = vmatpush1.xpose.msra.mxu0 0.0
        %389 = vmatprep.subr.mxu0 0.0
        %390 = vmatpush1.xpose.msra.mxu0 0.0
        %391 = vmatprep.subr.mxu0 0.0
        %392 = vmatpush1.xpose.msra.mxu0 0.0
        %393 = vmatprep.subr.mxu0 0.0
        %394 = vmatpush1.xpose.msra.mxu0 0.0
        %395 = vmatprep.subr.mxu0 0.0
        %396 = vmatpush1.xpose.msra.mxu0 0.0
        %397 = vmatprep.subr.mxu0 0.0
        %398 = vmatpush1.xpose.msra.mxu0 0.0
        %399 = vmatprep.subr.mxu0 0.0
        %400 = vmatpush1.xpose.msra.mxu0 0.0
        %401 = vmatprep.subr.mxu0 0.0
        %402 = vmatpush1.xpose.msra.mxu0 0.0
        %403 = vmatprep.subr.mxu0 0.0
        %404 = vmatpush1.xpose.msra.mxu0 0.0
        %405 = vmatprep.subr.mxu0 0.0
        %406 = vmatpush1.xpose.msra.mxu0 0.0
        %407 = vmatprep.subr.mxu0 0.0
        %408 = vmatpush1.xpose.msra.mxu0 0.0
        %409 = vmatprep.subr.mxu0 0.0
        %410 = vmatpush1.xpose.msra.mxu0 0.0
        %411 = vmatprep.subr.mxu0 0.0
        %412 = vmatpush1.xpose.msra.mxu0 0.0
        %413 = vmatprep.subr.mxu0 0.0
        %414 = vmatpush1.xpose.msra.mxu0 0.0
        %415 = vmatprep.subr.mxu0 0.0
        %416 = vmatpush1.xpose.msra.mxu0 0.0
        %417 = vmatprep.mubr.f32.mxu0 0.0
        %418 = vmatmul.mubr.f32.gmra.mrb[0].mxu0 %v349
        %v419 = vpop.f32.mrb[0].mxu0
        %v420 = vadd.f32 0.0, %v419
        %v421 = vpop.f32.mrb[0].mxu0
        %422 = vdwg.mxu0
        %v423 = vmul.f32 %v420, 0.25
        %v425 = vlaneseq
        %v426 = vshrl.u32 %v425, 7
        %v427 = vsub.s32 0, %v426
        %v428 = vrot.slane %v234, %v427
        %v430 = vadd.f32 %v423, %v428
        %vm431 = vcmask 64512
        %v432 = vsel %vm431, %v430, -inf
        %433 = vmax.xlane.f32.xlu0 %v432
        %v434 = vpop.xlane.xlu0 %433
        %v435 = vsub.f32 %v430, %v434
        %v436 = vmul.f32 %v435, 1.442695
        %v437 = vpow.pop %v436
        %v438 = vsel %vm431, %v437, 0.0
        %439 = vadd.xlane.f32.xlu0 %v438
        %v440 = vpop.xlane.xlu0 %439
        %v441 = vrcp.pop %v440
        %v442 = vmul.f32 %v437, %v441
        %443 = vrot.lane.b32.xlu0 %v342, 64
        %v444 = vpop.permute.xlu0 %443
        %v447 = vsel %vm431, %v442, 0
        %449 = vmatprep.subr.mxu0 0.0
        %450 = vmatpush1.msra.mxu0 %v444
        %451 = vmatprep.subr.mxu0 0.0
        %452 = vmatpush1.msra.mxu0 0.0
        %453 = vmatprep.subr.mxu0 0.0
        %454 = vmatpush1.msra.mxu0 0.0
        %455 = vmatprep.subr.mxu0 0.0
        %456 = vmatpush1.msra.mxu0 0.0
        %457 = vmatprep.subr.mxu0 0.0
        %458 = vmatpush1.msra.mxu0 0.0
        %459 = vmatprep.subr.mxu0 0.0
        %460 = vmatpush1.msra.mxu0 0.0
        %461 = vmatprep.subr.mxu0 0.0
        %462 = vmatpush1.msra.mxu0 0.0
        %463 = vmatprep.subr.mxu0 0.0
        %464 = vmatpush1.msra.mxu0 0.0
        %465 = vmatprep.subr.mxu0 0.0
        %466 = vmatpush1.msra.mxu0 0.0
        %467 = vmatprep.subr.mxu0 0.0
        %468 = vmatpush1.msra.mxu0 0.0
        %469 = vmatprep.subr.mxu0 0.0
        %470 = vmatpush1.msra.mxu0 0.0
        %471 = vmatprep.subr.mxu0 0.0
        %472 = vmatpush1.msra.mxu0 0.0
        %473 = vmatprep.subr.mxu0 0.0
        %474 = vmatpush1.msra.mxu0 0.0
        %475 = vmatprep.subr.mxu0 0.0
        %476 = vmatpush1.msra.mxu0 0.0
        %477 = vmatprep.subr.mxu0 0.0
        %478 = vmatpush1.msra.mxu0 0.0
        %479 = vmatprep.subr.mxu0 0.0
        %480 = vmatpush1.msra.mxu0 0.0
        %481 = vmatprep.subr.mxu0 0.0
        %482 = vmatpush1.msra.mxu0 0.0
        %483 = vmatprep.subr.mxu0 0.0
        %484 = vmatpush1.msra.mxu0 0.0
        %485 = vmatprep.subr.mxu0 0.0
        %486 = vmatpush1.msra.mxu0 0.0
        %487 = vmatprep.subr.mxu0 0.0
        %488 = vmatpush1.msra.mxu0 0.0
        %489 = vmatprep.subr.mxu0 0.0
        %490 = vmatpush1.msra.mxu0 0.0
        %491 = vmatprep.subr.mxu0 0.0
        %492 = vmatpush1.msra.mxu0 0.0
        %493 = vmatprep.subr.mxu0 0.0
        %494 = vmatpush1.msra.mxu0 0.0
        %495 = vmatprep.subr.mxu0 0.0
        %496 = vmatpush1.msra.mxu0 0.0
        %497 = vmatprep.subr.mxu0 0.0
        %498 = vmatpush1.msra.mxu0 0.0
        %499 = vmatprep.subr.mxu0 0.0
        %500 = vmatpush1.msra.mxu0 0.0
        %501 = vmatprep.subr.mxu0 0.0
        %502 = vmatpush1.msra.mxu0 0.0
        %503 = vmatprep.subr.mxu0 0.0
        %504 = vmatpush1.msra.mxu0 0.0
        %505 = vmatprep.subr.mxu0 0.0
        %506 = vmatpush1.msra.mxu0 0.0
        %507 = vmatprep.subr.mxu0 0.0
        %508 = vmatpush1.msra.mxu0 0.0
        %509 = vmatprep.subr.mxu0 0.0
        %510 = vmatpush1.msra.mxu0 0.0
        %511 = vmatprep.subr.mxu0 0.0
        %512 = vmatpush1.msra.mxu0 0.0
        %513 = vmatprep.mubr.f32.mxu0 0.0
        %514 = vmatmul.mubr.f32.gmra.mrb[0].mxu0 %v447
        %v515 = vpop.f32.mrb[0].mxu0
        %v516 = vadd.f32 0.0, %v515
        %v517 = vpop.f32.mrb[0].mxu0
        %518 = vdwg.mxu0
        %519 = vrot.lane.b32.xlu0 %v342, 112
        %v520 = vpop.permute.xlu0 %519
        %521 = vrot.lane.b32.xlu0 %v342, 80
        %v522 = vpop.permute.xlu0 %521
        %v523 = vsel %vm348, %v520, 0
        %v525 = vsel %vm348, %v522, 0
        %527 = vmatprep.subr.mxu0 0.0
        %528 = vmatpush1.xpose.msra.mxu0 %v525
        %529 = vmatprep.subr.mxu0 0.0
        %530 = vmatpush1.xpose.msra.mxu0 0.0
        %531 = vmatprep.subr.mxu0 0.0
        %532 = vmatpush1.xpose.msra.mxu0 0.0
        %533 = vmatprep.subr.mxu0 0.0
        %534 = vmatpush1.xpose.msra.mxu0 0.0
        %535 = vmatprep.subr.mxu0 0.0
        %536 = vmatpush1.xpose.msra.mxu0 0.0
        %537 = vmatprep.subr.mxu0 0.0
        %538 = vmatpush1.xpose.msra.mxu0 0.0
        %539 = vmatprep.subr.mxu0 0.0
        %540 = vmatpush1.xpose.msra.mxu0 0.0
        %541 = vmatprep.subr.mxu0 0.0
        %542 = vmatpush1.xpose.msra.mxu0 0.0
        %543 = vmatprep.subr.mxu0 0.0
        %544 = vmatpush1.xpose.msra.mxu0 0.0
        %545 = vmatprep.subr.mxu0 0.0
        %546 = vmatpush1.xpose.msra.mxu0 0.0
        %547 = vmatprep.subr.mxu0 0.0
        %548 = vmatpush1.xpose.msra.mxu0 0.0
        %549 = vmatprep.subr.mxu0 0.0
        %550 = vmatpush1.xpose.msra.mxu0 0.0
        %551 = vmatprep.subr.mxu0 0.0
        %552 = vmatpush1.xpose.msra.mxu0 0.0
        %553 = vmatprep.subr.mxu0 0.0
        %554 = vmatpush1.xpose.msra.mxu0 0.0
        %555 = vmatprep.subr.mxu0 0.0
        %556 = vmatpush1.xpose.msra.mxu0 0.0
        %557 = vmatprep.subr.mxu0 0.0
        %558 = vmatpush1.xpose.msra.mxu0 0.0
        %559 = vmatprep.subr.mxu0 0.0
        %560 = vmatpush1.xpose.msra.mxu0 0.0
        %561 = vmatprep.subr.mxu0 0.0
        %562 = vmatpush1.xpose.msra.mxu0 0.0
        %563 = vmatprep.subr.mxu0 0.0
        %564 = vmatpush1.xpose.msra.mxu0 0.0
        %565 = vmatprep.subr.mxu0 0.0
        %566 = vmatpush1.xpose.msra.mxu0 0.0
        %567 = vmatprep.subr.mxu0 0.0
        %568 = vmatpush1.xpose.msra.mxu0 0.0
        %569 = vmatprep.subr.mxu0 0.0
        %570 = vmatpush1.xpose.msra.mxu0 0.0
        %571 = vmatprep.subr.mxu0 0.0
        %572 = vmatpush1.xpose.msra.mxu0 0.0
        %573 = vmatprep.subr.mxu0 0.0
        %574 = vmatpush1.xpose.msra.mxu0 0.0
        %575 = vmatprep.subr.mxu0 0.0
        %576 = vmatpush1.xpose.msra.mxu0 0.0
        %577 = vmatprep.subr.mxu0 0.0
        %578 = vmatpush1.xpose.msra.mxu0 0.0
        %579 = vmatprep.subr.mxu0 0.0
        %580 = vmatpush1.xpose.msra.mxu0 0.0
        %581 = vmatprep.subr.mxu0 0.0
        %582 = vmatpush1.xpose.msra.mxu0 0.0
        %583 = vmatprep.subr.mxu0 0.0
        %584 = vmatpush1.xpose.msra.mxu0 0.0
        %585 = vmatprep.subr.mxu0 0.0
        %586 = vmatpush1.xpose.msra.mxu0 0.0
        %587 = vmatprep.subr.mxu0 0.0
        %588 = vmatpush1.xpose.msra.mxu0 0.0
        %589 = vmatprep.subr.mxu0 0.0
        %590 = vmatpush1.xpose.msra.mxu0 0.0
        %591 = vmatprep.mubr.f32.mxu0 0.0
        %592 = vmatmul.mubr.f32.gmra.mrb[0].mxu0 %v523
        %v593 = vpop.f32.mrb[0].mxu0
        %v594 = vadd.f32 0.0, %v593
        %v595 = vpop.f32.mrb[0].mxu0
        %596 = vdwg.mxu0
        %v597 = vmul.f32 %v594, 0.25
        %v598 = vadd.f32 %v597, %v428
        %v599 = vsel %vm431, %v598, -inf
        %600 = vmax.xlane.f32.xlu0 %v599
        %v601 = vpop.xlane.xlu0 %600
        %v602 = vsub.f32 %v598, %v601
        %v603 = vmul.f32 %v602, 1.442695
        %v604 = vpow.pop %v603
        %v605 = vsel %vm431, %v604, 0.0
        %606 = vadd.xlane.f32.xlu0 %v605
        %v607 = vpop.xlane.xlu0 %606
        %v608 = vrcp.pop %v607
        %v609 = vmul.f32 %v604, %v608
        %610 = vrot.lane.b32.xlu0 %v342, 48
        %v611 = vpop.permute.xlu0 %610
        %v614 = vsel %vm431, %v609, 0
        %616 = vmatprep.subr.mxu0 0.0
        %617 = vmatpush1.msra.mxu0 %v611
        %618 = vmatprep.subr.mxu0 0.0
        %619 = vmatpush1.msra.mxu0 0.0
        %620 = vmatprep.subr.mxu0 0.0
        %621 = vmatpush1.msra.mxu0 0.0
        %622 = vmatprep.subr.mxu0 0.0
        %623 = vmatpush1.msra.mxu0 0.0
        %624 = vmatprep.subr.mxu0 0.0
        %625 = vmatpush1.msra.mxu0 0.0
        %626 = vmatprep.subr.mxu0 0.0
        %627 = vmatpush1.msra.mxu0 0.0
        %628 = vmatprep.subr.mxu0 0.0
        %629 = vmatpush1.msra.mxu0 0.0
        %630 = vmatprep.subr.mxu0 0.0
        %631 = vmatpush1.msra.mxu0 0.0
        %632 = vmatprep.subr.mxu0 0.0
        %633 = vmatpush1.msra.mxu0 0.0
        %634 = vmatprep.subr.mxu0 0.0
        %635 = vmatpush1.msra.mxu0 0.0
        %636 = vmatprep.subr.mxu0 0.0
        %637 = vmatpush1.msra.mxu0 0.0
        %638 = vmatprep.subr.mxu0 0.0
        %639 = vmatpush1.msra.mxu0 0.0
        %640 = vmatprep.subr.mxu0 0.0
        %641 = vmatpush1.msra.mxu0 0.0
        %642 = vmatprep.subr.mxu0 0.0
        %643 = vmatpush1.msra.mxu0 0.0
        %644 = vmatprep.subr.mxu0 0.0
        %645 = vmatpush1.msra.mxu0 0.0
        %646 = vmatprep.subr.mxu0 0.0
        %647 = vmatpush1.msra.mxu0 0.0
        %648 = vmatprep.subr.mxu0 0.0
        %649 = vmatpush1.msra.mxu0 0.0
        %650 = vmatprep.subr.mxu0 0.0
        %651 = vmatpush1.msra.mxu0 0.0
        %652 = vmatprep.subr.mxu0 0.0
        %653 = vmatpush1.msra.mxu0 0.0
        %654 = vmatprep.subr.mxu0 0.0
        %655 = vmatpush1.msra.mxu0 0.0
        %656 = vmatprep.subr.mxu0 0.0
        %657 = vmatpush1.msra.mxu0 0.0
        %658 = vmatprep.subr.mxu0 0.0
        %659 = vmatpush1.msra.mxu0 0.0
        %660 = vmatprep.subr.mxu0 0.0
        %661 = vmatpush1.msra.mxu0 0.0
        %662 = vmatprep.subr.mxu0 0.0
        %663 = vmatpush1.msra.mxu0 0.0
        %664 = vmatprep.subr.mxu0 0.0
        %665 = vmatpush1.msra.mxu0 0.0
        %666 = vmatprep.subr.mxu0 0.0
        %667 = vmatpush1.msra.mxu0 0.0
        %668 = vmatprep.subr.mxu0 0.0
        %669 = vmatpush1.msra.mxu0 0.0
        %670 = vmatprep.subr.mxu0 0.0
        %671 = vmatpush1.msra.mxu0 0.0
        %672 = vmatprep.subr.mxu0 0.0
        %673 = vmatpush1.msra.mxu0 0.0
        %674 = vmatprep.subr.mxu0 0.0
        %675 = vmatpush1.msra.mxu0 0.0
        %676 = vmatprep.subr.mxu0 0.0
        %677 = vmatpush1.msra.mxu0 0.0
        %678 = vmatprep.subr.mxu0 0.0
        %679 = vmatpush1.msra.mxu0 0.0
        %680 = vmatprep.mubr.f32.mxu0 0.0
        %681 = vmatmul.mubr.f32.gmra.mrb[0].mxu0 %v614
        %v682 = vpop.f32.mrb[0].mxu0
        %v683 = vadd.f32 0.0, %v682
        %v684 = vpop.f32.mrb[0].mxu0
        %685 = vdwg.mxu0
        %687 = vrot.lane.b32.xlu0 %v683, 16
        %v688 = vpop.permute.xlu0 %687
        %v690 = vsel %vm348, %v516, %v688
        %v691 = vld [vmem:[%s266 + $0x1] sm:$0x1]
        %v692 = vlaneseq
        %v693 = vshrl.u32 %v692, 7
        %v694 = vsub.s32 0, %v693
        %v695 = vrot.slane %v691, %v694
        %700 = vrot.lane.b32.xlu0 %v262, 32
        %v701 = vpop.permute.xlu0 %700
        %702 = vrot.lane.b32.xlu0 %v263, 32
        %v703 = vpop.permute.xlu0 %702
        %704 = vrot.lane.b32.xlu0 %v264, 32
        %v705 = vpop.permute.xlu0 %704
        %706 = vrot.lane.b32.xlu0 %v265, 32
        %v707 = vpop.permute.xlu0 %706
        %v713 = vsel %vm237, %v690, 0
        %715 = vmatprep.subr.mxu0 0.0
        %716 = vmatpush1.msra.mxu0 %v701
        %717 = vmatprep.subr.mxu0 0.0
        %718 = vmatpush1.msra.mxu0 %v703
        %719 = vmatprep.subr.mxu0 0.0
        %720 = vmatpush1.msra.mxu0 %v705
        %721 = vmatprep.subr.mxu0 0.0
        %722 = vmatpush1.msra.mxu0 %v707
        %723 = vmatprep.subr.mxu0 0.0
        %724 = vmatpush1.msra.mxu0 0.0
        %725 = vmatprep.subr.mxu0 0.0
        %726 = vmatpush1.msra.mxu0 0.0
        %727 = vmatprep.subr.mxu0 0.0
        %728 = vmatpush1.msra.mxu0 0.0
        %729 = vmatprep.subr.mxu0 0.0
        %730 = vmatpush1.msra.mxu0 0.0
        %731 = vmatprep.subr.mxu0 0.0
        %732 = vmatpush1.msra.mxu0 0.0
        %733 = vmatprep.subr.mxu0 0.0
        %734 = vmatpush1.msra.mxu0 0.0
        %735 = vmatprep.subr.mxu0 0.0
        %736 = vmatpush1.msra.mxu0 0.0
        %737 = vmatprep.subr.mxu0 0.0
        %738 = vmatpush1.msra.mxu0 0.0
        %739 = vmatprep.subr.mxu0 0.0
        %740 = vmatpush1.msra.mxu0 0.0
        %741 = vmatprep.subr.mxu0 0.0
        %742 = vmatpush1.msra.mxu0 0.0
        %743 = vmatprep.subr.mxu0 0.0
        %744 = vmatpush1.msra.mxu0 0.0
        %745 = vmatprep.subr.mxu0 0.0
        %746 = vmatpush1.msra.mxu0 0.0
        %747 = vmatprep.subr.mxu0 0.0
        %748 = vmatpush1.msra.mxu0 0.0
        %749 = vmatprep.subr.mxu0 0.0
        %750 = vmatpush1.msra.mxu0 0.0
        %751 = vmatprep.subr.mxu0 0.0
        %752 = vmatpush1.msra.mxu0 0.0
        %753 = vmatprep.subr.mxu0 0.0
        %754 = vmatpush1.msra.mxu0 0.0
        %755 = vmatprep.subr.mxu0 0.0
        %756 = vmatpush1.msra.mxu0 0.0
        %757 = vmatprep.subr.mxu0 0.0
        %758 = vmatpush1.msra.mxu0 0.0
        %759 = vmatprep.subr.mxu0 0.0
        %760 = vmatpush1.msra.mxu0 0.0
        %761 = vmatprep.subr.mxu0 0.0
        %762 = vmatpush1.msra.mxu0 0.0
        %763 = vmatprep.subr.mxu0 0.0
        %764 = vmatpush1.msra.mxu0 0.0
        %765 = vmatprep.subr.mxu0 0.0
        %766 = vmatpush1.msra.mxu0 0.0
        %767 = vmatprep.subr.mxu0 0.0
        %768 = vmatpush1.msra.mxu0 0.0
        %769 = vmatprep.subr.mxu0 0.0
        %770 = vmatpush1.msra.mxu0 0.0
        %771 = vmatprep.subr.mxu0 0.0
        %772 = vmatpush1.msra.mxu0 0.0
        %773 = vmatprep.subr.mxu0 0.0
        %774 = vmatpush1.msra.mxu0 0.0
        %775 = vmatprep.subr.mxu0 0.0
        %776 = vmatpush1.msra.mxu0 0.0
        %777 = vmatprep.subr.mxu0 0.0
        %778 = vmatpush1.msra.mxu0 0.0
        %779 = vmatprep.mubr.f32.mxu0 0.0
        %780 = vmatmul.mubr.f32.gmra.mrb[0].mxu0 %v713
        %v781 = vpop.f32.mrb[0].mxu0
        %v782 = vadd.f32 %v695, %v781
        %v783 = vpop.f32.mrb[0].mxu0
        %784 = vdwg.mxu0
        %v785 = vadd.f32 %v782, %v261
        %v786 = vld [vmem:[%s266 + $0x2] sm:$0x1]
        %v787 = vld [vmem:[%s266 + $0x3] sm:$0x1]
        %v788 = vsel %vm237, %v785, 0.0
        %789 = vadd.xlane.f32.xlu0 %v788
        %v790 = vpop.xlane.xlu0 %789
        %v791 = vmul.f32 %v790, %v241
        %v792 = vsub.f32 %v785, %v791
        %v793 = vmul.f32 %v792, %v792
        %v794 = vsel %vm237, %v793, 0.0
        %795 = vadd.xlane.f32.xlu0 %v794
        %v796 = vpop.xlane.xlu0 %795
        %v797 = vmul.f32 %v796, %v241
        %v798 = vadd.f32 %v797, 1e-12
        %v799 = vrsqrt.pop %v798
        %v800 = vmul.f32 %v792, %v799
        %v801 = vlaneseq
        %v802 = vshrl.u32 %v801, 7
        %v803 = vsub.s32 0, %v802
        %v804 = vrot.slane %v786, %v803
        %v805 = vmul.f32 %v800, %v804
        %v806 = vlaneseq
        %v807 = vshrl.u32 %v806, 7
        %v808 = vsub.s32 0, %v807
        %v809 = vrot.slane %v787, %v808
        %v810 = vadd.f32 %v805, %v809
        %v811 = vld [vmem:[%s3] sm:$0xff]
        %v812 = vld [vmem:[%s3 + $0x8] sm:$0xff]
        %v813 = vld [vmem:[%s3 + $0x10] sm:$0xff]
        %v814 = vld [vmem:[%s3 + $0x18] sm:$0xff]
        %v815 = vld [vmem:[%s3 + $0x20] sm:$0xff]
        %v816 = vld [vmem:[%s3 + $0x28] sm:$0xff]
        %v817 = vld [vmem:[%s3 + $0x30] sm:$0xff]
        %v818 = vld [vmem:[%s3 + $0x38] sm:$0xff]
        %v819 = vld [vmem:[%s3 + $0x40] sm:$0xff]
        %v820 = vld [vmem:[%s3 + $0x48] sm:$0xff]
        %v821 = vld [vmem:[%s3 + $0x50] sm:$0xff]
        %v822 = vld [vmem:[%s3 + $0x58] sm:$0xff]
        %v823 = vld [vmem:[%s266 + $0x4] sm:$0x1]
        %v824 = vlaneseq
        %v825 = vshrl.u32 %v824, 7
        %v826 = vsub.s32 0, %v825
        %v827 = vrot.slane %v823, %v826
        %v829 = vsel %vm237, %v810, 0
        %831 = vmatprep.subr.mxu0 0.0
        %832 = vmatpush1.msra.mxu0 %v811
        %833 = vmatprep.subr.mxu0 0.0
        %834 = vmatpush1.msra.mxu0 %v812
        %835 = vmatprep.subr.mxu0 0.0
        %836 = vmatpush1.msra.mxu0 %v813
        %837 = vmatprep.subr.mxu0 0.0
        %838 = vmatpush1.msra.mxu0 %v814
        %839 = vmatprep.subr.mxu0 0.0
        %840 = vmatpush1.msra.mxu0 0.0
        %841 = vmatprep.subr.mxu0 0.0
        %842 = vmatpush1.msra.mxu0 0.0
        %843 = vmatprep.subr.mxu0 0.0
        %844 = vmatpush1.msra.mxu0 0.0
        %845 = vmatprep.subr.mxu0 0.0
        %846 = vmatpush1.msra.mxu0 0.0
        %847 = vmatprep.subr.mxu0 0.0
        %848 = vmatpush1.msra.mxu0 0.0
        %849 = vmatprep.subr.mxu0 0.0
        %850 = vmatpush1.msra.mxu0 0.0
        %851 = vmatprep.subr.mxu0 0.0
        %852 = vmatpush1.msra.mxu0 0.0
        %853 = vmatprep.subr.mxu0 0.0
        %854 = vmatpush1.msra.mxu0 0.0
        %855 = vmatprep.subr.mxu0 0.0
        %856 = vmatpush1.msra.mxu0 0.0
        %857 = vmatprep.subr.mxu0 0.0
        %858 = vmatpush1.msra.mxu0 0.0
        %859 = vmatprep.subr.mxu0 0.0
        %860 = vmatpush1.msra.mxu0 0.0
        %861 = vmatprep.subr.mxu0 0.0
        %862 = vmatpush1.msra.mxu0 0.0
        %863 = vmatprep.subr.mxu0 0.0
        %864 = vmatpush1.msra.mxu0 0.0
        %865 = vmatprep.subr.mxu0 0.0
        %866 = vmatpush1.msra.mxu0 0.0
        %867 = vmatprep.subr.mxu0 0.0
        %868 = vmatpush1.msra.mxu0 0.0
        %869 = vmatprep.subr.mxu0 0.0
        %870 = vmatpush1.msra.mxu0 0.0
        %871 = vmatprep.subr.mxu0 0.0
        %872 = vmatpush1.msra.mxu0 0.0
        %873 = vmatprep.subr.mxu0 0.0
        %874 = vmatpush1.msra.mxu0 0.0
        %875 = vmatprep.subr.mxu0 0.0
        %876 = vmatpush1.msra.mxu0 0.0
        %877 = vmatprep.subr.mxu0 0.0
        %878 = vmatpush1.msra.mxu0 0.0
        %879 = vmatprep.subr.mxu0 0.0
        %880 = vmatpush1.msra.mxu0 0.0
        %881 = vmatprep.subr.mxu0 0.0
        %882 = vmatpush1.msra.mxu0 0.0
        %883 = vmatprep.subr.mxu0 0.0
        %884 = vmatpush1.msra.mxu0 0.0
        %885 = vmatprep.subr.mxu0 0.0
        %886 = vmatpush1.msra.mxu0 0.0
        %887 = vmatprep.subr.mxu0 0.0
        %888 = vmatpush1.msra.mxu0 0.0
        %889 = vmatprep.subr.mxu0 0.0
        %890 = vmatpush1.msra.mxu0 0.0
        %891 = vmatprep.subr.mxu0 0.0
        %892 = vmatpush1.msra.mxu0 0.0
        %893 = vmatprep.subr.mxu0 0.0
        %894 = vmatpush1.msra.mxu0 0.0
        %895 = vmatprep.mubr.f32.mxu0 0.0
        %896 = vmatmul.mubr.f32.gmra.mrb[0].mxu0 %v829
        %v897 = vpop.f32.mrb[0].mxu0
        %v898 = vadd.f32 %v827, %v897
        %v899 = vpop.f32.mrb[0].mxu0
        %900 = vdwg.mxu0
        %v901 = vmul.f32 %v898, 0.5
        %v902 = vmul.f32 %v898, 0.044715
        %v903 = vmul.f32 %v902, %v898
        %v904 = vmul.f32 %v903, %v898
        %v905 = vadd.f32 %v898, %v904
        %v906 = vmul.f32 %v905, 0.7978846
        %v907 = vtanh.pop %v906
        %v908 = vadd.f32 %v907, 1.0
        %v909 = vmul.f32 %v901, %v908
        %v910 = vld [vmem:[%s266 + $0x5] sm:$0x1]
        %v911 = vlaneseq
        %v912 = vshrl.u32 %v911, 7
        %v913 = vsub.s32 0, %v912
        %v914 = vrot.slane %v910, %v913
        %vm915 = vcmask 523264
        %v917 = vsel %vm915, %v909, 0
        %919 = vmatprep.subr.mxu0 0.0
        %920 = vmatpush1.msra.mxu0 %v815
        %921 = vmatprep.subr.mxu0 0.0
        %922 = vmatpush1.msra.mxu0 %v816
        %923 = vmatprep.subr.mxu0 0.0
        %924 = vmatpush1.msra.mxu0 %v817
        %925 = vmatprep.subr.mxu0 0.0
        %926 = vmatpush1.msra.mxu0 %v818
        %927 = vmatprep.subr.mxu0 0.0
        %928 = vmatpush1.msra.mxu0 %v819
        %929 = vmatprep.subr.mxu0 0.0
        %930 = vmatpush1.msra.mxu0 %v820
        %931 = vmatprep.subr.mxu0 0.0
        %932 = vmatpush1.msra.mxu0 %v821
        %933 = vmatprep.subr.mxu0 0.0
        %934 = vmatpush1.msra.mxu0 %v822
        %935 = vmatprep.subr.mxu0 0.0
        %936 = vmatpush1.msra.mxu0 0.0
        %937 = vmatprep.subr.mxu0 0.0
        %938 = vmatpush1.msra.mxu0 0.0
        %939 = vmatprep.subr.mxu0 0.0
        %940 = vmatpush1.msra.mxu0 0.0
        %941 = vmatprep.subr.mxu0 0.0
        %942 = vmatpush1.msra.mxu0 0.0
        %943 = vmatprep.subr.mxu0 0.0
        %944 = vmatpush1.msra.mxu0 0.0
        %945 = vmatprep.subr.mxu0 0.0
        %946 = vmatpush1.msra.mxu0 0.0
        %947 = vmatprep.subr.mxu0 0.0
        %948 = vmatpush1.msra.mxu0 0.0
        %949 = vmatprep.subr.mxu0 0.0
        %950 = vmatpush1.msra.mxu0 0.0
        %951 = vmatprep.subr.mxu0 0.0
        %952 = vmatpush1.msra.mxu0 0.0
        %953 = vmatprep.subr.mxu0 0.0
        %954 = vmatpush1.msra.mxu0 0.0
        %955 = vmatprep.subr.mxu0 0.0
        %956 = vmatpush1.msra.mxu0 0.0
        %957 = vmatprep.subr.mxu0 0.0
        %958 = vmatpush1.msra.mxu0 0.0
        %959 = vmatprep.subr.mxu0 0.0
        %960 = vmatpush1.msra.mxu0 0.0
        %961 = vmatprep.subr.mxu0 0.0
        %962 = vmatpush1.msra.mxu0 0.0
        %963 = vmatprep.subr.mxu0 0.0
        %964 = vmatpush1.msra.mxu0 0.0
        %965 = vmatprep.subr.mxu0 0.0
        %966 = vmatpush1.msra.mxu0 0.0
        %967 = vmatprep.subr.mxu0 0.0
        %968 = vmatpush1.msra.mxu0 0.0
        %969 = vmatprep.subr.mxu0 0.0
        %970 = vmatpush1.msra.mxu0 0.0
        %971 = vmatprep.subr.mxu0 0.0
        %972 = vmatpush1.msra.mxu0 0.0
        %973 = vmatprep.subr.mxu0 0.0
        %974 = vmatpush1.msra.mxu0 0.0
        %975 = vmatprep.subr.mxu0 0.0
        %976 = vmatpush1.msra.mxu0 0.0
        %977 = vmatprep.subr.mxu0 0.0
        %978 = vmatpush1.msra.mxu0 0.0
        %979 = vmatprep.subr.mxu0 0.0
        %980 = vmatpush1.msra.mxu0 0.0
        %981 = vmatprep.subr.mxu0 0.0
        %982 = vmatpush1.msra.mxu0 0.0
        %983 = vmatprep.mubr.f32.mxu0 0.0
        %984 = vmatmul.mubr.f32.gmra.mrb[0].mxu0 %v917
        %v985 = vpop.f32.mrb[0].mxu0
        %v986 = vadd.f32 %v914, %v985
        %v987 = vpop.f32.mrb[0].mxu0
        %988 = vdwg.mxu0
        %v989 = vadd.f32 %v986, %v810
        %v990 = vld [vmem:[%s266 + $0x6] sm:$0x1]
        %v991 = vld [vmem:[%s266 + $0x7] sm:$0x1]
        %v992 = vsel %vm237, %v989, 0.0
        %993 = vadd.xlane.f32.xlu0 %v992
        %v994 = vpop.xlane.xlu0 %993
        %v995 = vmul.f32 %v994, %v241
        %v996 = vsub.f32 %v989, %v995
        %v997 = vmul.f32 %v996, %v996
        %v998 = vsel %vm237, %v997, 0.0
        %999 = vadd.xlane.f32.xlu0 %v998
        %v1000 = vpop.xlane.xlu0 %999
        %v1001 = vmul.f32 %v1000, %v241
        %v1002 = vadd.f32 %v1001, 1e-12
        %v1003 = vrsqrt.pop %v1002
        %v1004 = vmul.f32 %v996, %v1003
        %v1005 = vlaneseq
        %v1006 = vshrl.u32 %v1005, 7
        %v1007 = vsub.s32 0, %v1006
        %v1008 = vrot.slane %v990, %v1007
        %v1009 = vmul.f32 %v1004, %v1008
        %v1010 = vlaneseq
        %v1011 = vshrl.u32 %v1010, 7
        %v1012 = vsub.s32 0, %v1011
        %v1013 = vrot.slane %v991, %v1012
        %v1014 = vadd.f32 %v1009, %v1013
        %s1015 = scalar_lea.vmem %s2, 32
        %v1016 = vld [vmem:[%s1015] sm:$0xff]
        %v1017 = vld [vmem:[%s1015 + $0x8] sm:$0xff]
        %v1018 = vld [vmem:[%s1015 + $0x10] sm:$0xff]
        %v1019 = vld [vmem:[%s1015 + $0x18] sm:$0xff]
        %s1020 = scalar_lea.vmem %s4, 16
        %v1021 = vld [vmem:[%s1020] sm:$0x1]
        %v1022 = vlaneseq
        %v1023 = vshrl.u32 %v1022, 7
        %v1024 = vsub.s32 0, %v1023
        %v1025 = vrot.slane %v1021, %v1024
        %v1027 = vsel %vm237, %v1014, 0
        %1029 = vmatprep.subr.mxu0 0.0
        %1030 = vmatpush1.msra.mxu0 %v1016
        %1031 = vmatprep.subr.mxu0 0.0
        %1032 = vmatpush1.msra.mxu0 %v1017
        %1033 = vmatprep.subr.mxu0 0.0
        %1034 = vmatpush1.msra.mxu0 %v1018
        %1035 = vmatprep.subr.mxu0 0.0
        %1036 = vmatpush1.msra.mxu0 %v1019
        %1037 = vmatprep.subr.mxu0 0.0
        %1038 = vmatpush1.msra.mxu0 0.0
        %1039 = vmatprep.subr.mxu0 0.0
        %1040 = vmatpush1.msra.mxu0 0.0
        %1041 = vmatprep.subr.mxu0 0.0
        %1042 = vmatpush1.msra.mxu0 0.0
        %1043 = vmatprep.subr.mxu0 0.0
        %1044 = vmatpush1.msra.mxu0 0.0
        %1045 = vmatprep.subr.mxu0 0.0
        %1046 = vmatpush1.msra.mxu0 0.0
        %1047 = vmatprep.subr.mxu0 0.0
        %1048 = vmatpush1.msra.mxu0 0.0
        %1049 = vmatprep.subr.mxu0 0.0
        %1050 = vmatpush1.msra.mxu0 0.0
        %1051 = vmatprep.subr.mxu0 0.0
        %1052 = vmatpush1.msra.mxu0 0.0
        %1053 = vmatprep.subr.mxu0 0.0
        %1054 = vmatpush1.msra.mxu0 0.0
        %1055 = vmatprep.subr.mxu0 0.0
        %1056 = vmatpush1.msra.mxu0 0.0
        %1057 = vmatprep.subr.mxu0 0.0
        %1058 = vmatpush1.msra.mxu0 0.0
        %1059 = vmatprep.subr.mxu0 0.0
        %1060 = vmatpush1.msra.mxu0 0.0
        %1061 = vmatprep.subr.mxu0 0.0
        %1062 = vmatpush1.msra.mxu0 0.0
        %1063 = vmatprep.subr.mxu0 0.0
        %1064 = vmatpush1.msra.mxu0 0.0
        %1065 = vmatprep.subr.mxu0 0.0
        %1066 = vmatpush1.msra.mxu0 0.0
        %1067 = vmatprep.subr.mxu0 0.0
        %1068 = vmatpush1.msra.mxu0 0.0
        %1069 = vmatprep.subr.mxu0 0.0
        %1070 = vmatpush1.msra.mxu0 0.0
        %1071 = vmatprep.subr.mxu0 0.0
        %1072 = vmatpush1.msra.mxu0 0.0
        %1073 = vmatprep.subr.mxu0 0.0
        %1074 = vmatpush1.msra.mxu0 0.0
        %1075 = vmatprep.subr.mxu0 0.0
        %1076 = vmatpush1.msra.mxu0 0.0
        %1077 = vmatprep.subr.mxu0 0.0
        %1078 = vmatpush1.msra.mxu0 0.0
        %1079 = vmatprep.subr.mxu0 0.0
        %1080 = vmatpush1.msra.mxu0 0.0
        %1081 = vmatprep.subr.mxu0 0.0
        %1082 = vmatpush1.msra.mxu0 0.0
        %1083 = vmatprep.subr.mxu0 0.0
        %1084 = vmatpush1.msra.mxu0 0.0
        %1085 = vmatprep.subr.mxu0 0.0
        %1086 = vmatpush1.msra.mxu0 0.0
        %1087 = vmatprep.subr.mxu0 0.0
        %1088 = vmatpush1.msra.mxu0 0.0
        %1089 = vmatprep.subr.mxu0 0.0
        %1090 = vmatpush1.msra.mxu0 0.0
        %1091 = vmatprep.subr.mxu0 0.0
        %1092 = vmatpush1.msra.mxu0 0.0
        %1093 = vmatprep.mubr.f32.mxu0 0.0
        %1094 = vmatmul.mubr.f32.gmra.mrb[0].mxu0 %v1027
        %v1095 = vpop.f32.mrb[0].mxu0
        %v1096 = vadd.f32 %v1025, %v1095
        %v1097 = vpop.f32.mrb[0].mxu0
        %1098 = vdwg.mxu0
        %1100 = vrot.lane.b32.xlu0 %v1096, 96
        %v1101 = vpop.permute.xlu0 %1100
        %v1102 = vsel %vm348, %v1096, 0
        %v1104 = vsel %vm348, %v1101, 0
        %1106 = vmatprep.subr.mxu0 0.0
        %1107 = vmatpush1.xpose.msra.mxu0 %v1104
        %1108 = vmatprep.subr.mxu0 0.0
        %1109 = vmatpush1.xpose.msra.mxu0 0.0
        %1110 = vmatprep.subr.mxu0 0.0
        %1111 = vmatpush1.xpose.msra.mxu0 0.0
        %1112 = vmatprep.subr.mxu0 0.0
        %1113 = vmatpush1.xpose.msra.mxu0 0.0
        %1114 = vmatprep.subr.mxu0 0.0
        %1115 = vmatpush1.xpose.msra.mxu0 0.0
        %1116 = vmatprep.subr.mxu0 0.0
        %1117 = vmatpush1.xpose.msra.mxu0 0.0
        %1118 = vmatprep.subr.mxu0 0.0
        %1119 = vmatpush1.xpose.msra.mxu0 0.0
        %1120 = vmatprep.subr.mxu0 0.0
        %1121 = vmatpush1.xpose.msra.mxu0 0.0
        %1122 = vmatprep.subr.mxu0 0.0
        %1123 = vmatpush1.xpose.msra.mxu0 0.0
        %1124 = vmatprep.subr.mxu0 0.0
        %1125 = vmatpush1.xpose.msra.mxu0 0.0
        %1126 = vmatprep.subr.mxu0 0.0
        %1127 = vmatpush1.xpose.msra.mxu0 0.0
        %1128 = vmatprep.subr.mxu0 0.0
        %1129 = vmatpush1.xpose.msra.mxu0 0.0
        %1130 = vmatprep.subr.mxu0 0.0
        %1131 = vmatpush1.xpose.msra.mxu0 0.0
        %1132 = vmatprep.subr.mxu0 0.0
        %1133 = vmatpush1.xpose.msra.mxu0 0.0
        %1134 = vmatprep.subr.mxu0 0.0
        %1135 = vmatpush1.xpose.msra.mxu0 0.0
        %1136 = vmatprep.subr.mxu0 0.0
        %1137 = vmatpush1.xpose.msra.mxu0 0.0
        %1138 = vmatprep.subr.mxu0 0.0
        %1139 = vmatpush1.xpose.msra.mxu0 0.0
        %1140 = vmatprep.subr.mxu0 0.0
        %1141 = vmatpush1.xpose.msra.mxu0 0.0
        %1142 = vmatprep.subr.mxu0 0.0
        %1143 = vmatpush1.xpose.msra.mxu0 0.0
        %1144 = vmatprep.subr.mxu0 0.0
        %1145 = vmatpush1.xpose.msra.mxu0 0.0
        %1146 = vmatprep.subr.mxu0 0.0
        %1147 = vmatpush1.xpose.msra.mxu0 0.0
        %1148 = vmatprep.subr.mxu0 0.0
        %1149 = vmatpush1.xpose.msra.mxu0 0.0
        %1150 = vmatprep.subr.mxu0 0.0
        %1151 = vmatpush1.xpose.msra.mxu0 0.0
        %1152 = vmatprep.subr.mxu0 0.0
        %1153 = vmatpush1.xpose.msra.mxu0 0.0
        %1154 = vmatprep.subr.mxu0 0.0
        %1155 = vmatpush1.xpose.msra.mxu0 0.0
        %1156 = vmatprep.subr.mxu0 0.0
        %1157 = vmatpush1.xpose.msra.mxu0 0.0
        %1158 = vmatprep.subr.mxu0 0.0
        %1159 = vmatpush1.xpose.msra.mxu0 0.0
        %1160 = vmatprep.subr.mxu0 0.0
        %1161 = vmatpush1.xpose.msra.mxu0 0.0
        %1162 = vmatprep.subr.mxu0 0.0
        %1163 = vmatpush1.xpose.msra.mxu0 0.0
        %1164 = vmatprep.subr.mxu0 0.0
        %1165 = vmatpush1.xpose.msra.mxu0 0.0
        %1166 = vmatprep.subr.mxu0 0.0
        %1167 = vmatpush1.xpose.msra.mxu0 0.0
        %1168 = vmatprep.subr.mxu0 0.0
        %1169 = vmatpush1.xpose.msra.mxu0 0.0
        %1170 = vmatprep.mubr.f32.mxu0 0.0
        %1171 = vmatmul.mubr.f32.gmra.mrb[0].mxu0 %v1102
        %v1172 = vpop.f32.mrb[0].mxu0
        %v1173 = vadd.f32 0.0, %v1172
        %v1174 = vpop.f32.mrb[0].mxu0
        %1175 = vdwg.mxu0
        %v1176 = vmul.f32 %v1173, 0.25
        %v1177 = vadd.f32 %v1176, %v428
        %v1178 = vsel %vm431, %v1177, -inf
        %1179 = vmax.xlane.f32.xlu0 %v1178
        %v1180 = vpop.xlane.xlu0 %1179
        %v1181 = vsub.f32 %v1177, %v1180
        %v1182 = vmul.f32 %v1181, 1.442695
        %v1183 = vpow.pop %v1182
        %v1184 = vsel %vm431, %v1183, 0.0
        %1185 = vadd.xlane.f32.xlu0 %v1184
        %v1186 = vpop.xlane.xlu0 %1185
        %v1187 = vrcp.pop %v1186
        %v1188 = vmul.f32 %v1183, %v1187
        %1189 = vrot.lane.b32.xlu0 %v1096, 64
        %v1190 = vpop.permute.xlu0 %1189
        %v1193 = vsel %vm431, %v1188, 0
        %1195 = vmatprep.subr.mxu0 0.0
        %1196 = vmatpush1.msra.mxu0 %v1190
        %1197 = vmatprep.subr.mxu0 0.0
        %1198 = vmatpush1.msra.mxu0 0.0
        %1199 = vmatprep.subr.mxu0 0.0
        %1200 = vmatpush1.msra.mxu0 0.0
        %1201 = vmatprep.subr.mxu0 0.0
        %1202 = vmatpush1.msra.mxu0 0.0
        %1203 = vmatprep.subr.mxu0 0.0
        %1204 = vmatpush1.msra.mxu0 0.0
        %1205 = vmatprep.subr.mxu0 0.0
        %1206 = vmatpush1.msra.mxu0 0.0
        %1207 = vmatprep.subr.mxu0 0.0
        %1208 = vmatpush1.msra.mxu0 0.0
        %1209 = vmatprep.subr.mxu0 0.0
        %1210 = vmatpush1.msra.mxu0 0.0
        %1211 = vmatprep.subr.mxu0 0.0
        %1212 = vmatpush1.msra.mxu0 0.0
        %1213 = vmatprep.subr.mxu0 0.0
        %1214 = vmatpush1.msra.mxu0 0.0
        %1215 = vmatprep.subr.mxu0 0.0
        %1216 = vmatpush1.msra.mxu0 0.0
        %1217 = vmatprep.subr.mxu0 0.0
        %1218 = vmatpush1.msra.mxu0 0.0
        %1219 = vmatprep.subr.mxu0 0.0
        %1220 = vmatpush1.msra.mxu0 0.0
        %1221 = vmatprep.subr.mxu0 0.0
        %1222 = vmatpush1.msra.mxu0 0.0
        %1223 = vmatprep.subr.mxu0 0.0
        %1224 = vmatpush1.msra.mxu0 0.0
        %1225 = vmatprep.subr.mxu0 0.0
        %1226 = vmatpush1.msra.mxu0 0.0
        %1227 = vmatprep.subr.mxu0 0.0
        %1228 = vmatpush1.msra.mxu0 0.0
        %1229 = vmatprep.subr.mxu0 0.0
        %1230 = vmatpush1.msra.mxu0 0.0
        %1231 = vmatprep.subr.mxu0 0.0
        %1232 = vmatpush1.msra.mxu0 0.0
        %1233 = vmatprep.subr.mxu0 0.0
        %1234 = vmatpush1.msra.mxu0 0.0
        %1235 = vmatprep.subr.mxu0 0.0
        %1236 = vmatpush1.msra.mxu0 0.0
        %1237 = vmatprep.subr.mxu0 0.0
        %1238 = vmatpush1.msra.mxu0 0.0
        %1239 = vmatprep.subr.mxu0 0.0
        %1240 = vmatpush1.msra.mxu0 0.0
        %1241 = vmatprep.subr.mxu0 0.0
        %1242 = vmatpush1.msra.mxu0 0.0
        %1243 = vmatprep.subr.mxu0 0.0
        %1244 = vmatpush1.msra.mxu0 0.0
        %1245 = vmatprep.subr.mxu0 0.0
        %1246 = vmatpush1.msra.mxu0 0.0
        %1247 = vmatprep.subr.mxu0 0.0
        %1248 = vmatpush1.msra.mxu0 0.0
        %1249 = vmatprep.subr.mxu0 0.0
        %1250 = vmatpush1.msra.mxu0 0.0
        %1251 = vmatprep.subr.mxu0 0.0
        %1252 = vmatpush1.msra.mxu0 0.0
        %1253 = vmatprep.subr.mxu0 0.0
        %1254 = vmatpush1.msra.mxu0 0.0
        %1255 = vmatprep.subr.mxu0 0.0
        %1256 = vmatpush1.msra.mxu0 0.0
        %1257 = vmatprep.subr.mxu0 0.0
        %1258 = vmatpush1.msra.mxu0 0.0
        %1259 = vmatprep.mubr.f32.mxu0 0.0
        %1260 = vmatmul.mubr.f32.gmra.mrb[0].mxu0 %v1193
        %v1261 = vpop.f32.mrb[0].mxu0
        %v1262 = vadd.f32 0.0, %v1261
        %v1263 = vpop.f32.mrb[0].mxu0
        %1264 = vdwg.mxu0
        %1265 = vrot.lane.b32.xlu0 %v1096, 112
        %v1266 = vpop.permute.xlu0 %1265
        %1267 = vrot.lane.b32.xlu0 %v1096, 80
        %v1268 = vpop.permute.xlu0 %1267
        %v1269 = vsel %vm348, %v1266, 0
        %v1271 = vsel %vm348, %v1268, 0
        %1273 = vmatprep.subr.mxu0 0.0
        %1274 = vmatpush1.xpose.msra.mxu0 %v1271
        %1275 = vmatprep.subr.mxu0 0.0
        %1276 = vmatpush1.xpose.msra.mxu0 0.0
        %1277 = vmatprep.subr.mxu0 0.0
        %1278 = vmatpush1.xpose.msra.mxu0 0.0
        %1279 = vmatprep.subr.mxu0 0.0
        %1280 = vmatpush1.xpose.msra.mxu0 0.0
        %1281 = vmatprep.subr.mxu0 0.0
        %1282 = vmatpush1.xpose.msra.mxu0 0.0
        %1283 = vmatprep.subr.mxu0 0.0
        %1284 = vmatpush1.xpose.msra.mxu0 0.0
        %1285 = vmatprep.subr.mxu0 0.0
        %1286 = vmatpush1.xpose.msra.mxu0 0.0
        %1287 = vmatprep.subr.mxu0 0.0
        %1288 = vmatpush1.xpose.msra.mxu0 0.0
        %1289 = vmatprep.subr.mxu0 0.0
        %1290 = vmatpush1.xpose.msra.mxu0 0.0
        %1291 = vmatprep.subr.mxu0 0.0
        %1292 = vmatpush1.xpose.msra.mxu0 0.0
        %1293 = vmatprep.subr.mxu0 0.0
        %1294 = vmatpush1.xpose.msra.mxu0 0.0
        %1295 = vmatprep.subr.mxu0 0.0
        %1296 = vmatpush1.xpose.msra.mxu0 0.0
        %1297 = vmatprep.subr.mxu0 0.0
        %1298 = vmatpush1.xpose.msra.mxu0 0.0
        %1299 = vmatprep.subr.mxu0 0.0
        %1300 = vmatpush1.xpose.msra.mxu0 0.0
        %1301 = vmatprep.subr.mxu0 0.0
        %1302 = vmatpush1.xpose.msra.mxu0 0.0
        %1303 = vmatprep.subr.mxu0 0.0
        %1304 = vmatpush1.xpose.msra.mxu0 0.0
        %1305 = vmatprep.subr.mxu0 0.0
        %1306 = vmatpush1.xpose.msra.mxu0 0.0
        %1307 = vmatprep.subr.mxu0 0.0
        %1308 = vmatpush1.xpose.msra.mxu0 0.0
        %1309 = vmatprep.subr.mxu0 0.0
        %1310 = vmatpush1.xpose.msra.mxu0 0.0
        %1311 = vmatprep.subr.mxu0 0.0
        %1312 = vmatpush1.xpose.msra.mxu0 0.0
        %1313 = vmatprep.subr.mxu0 0.0
        %1314 = vmatpush1.xpose.msra.mxu0 0.0
        %1315 = vmatprep.subr.mxu0 0.0
        %1316 = vmatpush1.xpose.msra.mxu0 0.0
        %1317 = vmatprep.subr.mxu0 0.0
        %1318 = vmatpush1.xpose.msra.mxu0 0.0
        %1319 = vmatprep.subr.mxu0 0.0
        %1320 = vmatpush1.xpose.msra.mxu0 0.0
        %1321 = vmatprep.subr.mxu0 0.0
        %1322 = vmatpush1.xpose.msra.mxu0 0.0
        %1323 = vmatprep.subr.mxu0 0.0
        %1324 = vmatpush1.xpose.msra.mxu0 0.0
        %1325 = vmatprep.subr.mxu0 0.0
        %1326 = vmatpush1.xpose.msra.mxu0 0.0
        %1327 = vmatprep.subr.mxu0 0.0
        %1328 = vmatpush1.xpose.msra.mxu0 0.0
        %1329 = vmatprep.subr.mxu0 0.0
        %1330 = vmatpush1.xpose.msra.mxu0 0.0
        %1331 = vmatprep.subr.mxu0 0.0
        %1332 = vmatpush1.xpose.msra.mxu0 0.0
        %1333 = vmatprep.subr.mxu0 0.0
        %1334 = vmatpush1.xpose.msra.mxu0 0.0
        %1335 = vmatprep.subr.mxu0 0.0
        %1336 = vmatpush1.xpose.msra.mxu0 0.0
        %1337 = vmatprep.mubr.f32.mxu0 0.0
        %1338 = vmatmul.mubr.f32.gmra.mrb[0].mxu0 %v1269
        %v1339 = vpop.f32.mrb[0].mxu0
        %v1340 = vadd.f32 0.0, %v1339
        %v1341 = vpop.f32.mrb[0].mxu0
        %1342 = vdwg.mxu0
        %v1343 = vmul.f32 %v1340, 0.25
        %v1344 = vadd.f32 %v1343, %v428
        %v1345 = vsel %vm431, %v1344, -inf
        %1346 = vmax.xlane.f32.xlu0 %v1345
        %v1347 = vpop.xlane.xlu0 %1346
        %v1348 = vsub.f32 %v1344, %v1347
        %v1349 = vmul.f32 %v1348, 1.442695
        %v1350 = vpow.pop %v1349
        %v1351 = vsel %vm431, %v1350, 0.0
        %1352 = vadd.xlane.f32.xlu0 %v1351
        %v1353 = vpop.xlane.xlu0 %1352
        %v1354 = vrcp.pop %v1353
        %v1355 = vmul.f32 %v1350, %v1354
        %1356 = vrot.lane.b32.xlu0 %v1096, 48
        %v1357 = vpop.permute.xlu0 %1356
        %v1360 = vsel %vm431, %v1355, 0
        %1362 = vmatprep.subr.mxu0 0.0
        %1363 = vmatpush1.msra.mxu0 %v1357
        %1364 = vmatprep.subr.mxu0 0.0
        %1365 = vmatpush1.msra.mxu0 0.0
        %1366 = vmatprep.subr.mxu0 0.0
        %1367 = vmatpush1.msra.mxu0 0.0
        %1368 = vmatprep.subr.mxu0 0.0
        %1369 = vmatpush1.msra.mxu0 0.0
        %1370 = vmatprep.subr.mxu0 0.0
        %1371 = vmatpush1.msra.mxu0 0.0
        %1372 = vmatprep.subr.mxu0 0.0
        %1373 = vmatpush1.msra.mxu0 0.0
        %1374 = vmatprep.subr.mxu0 0.0
        %1375 = vmatpush1.msra.mxu0 0.0
        %1376 = vmatprep.subr.mxu0 0.0
        %1377 = vmatpush1.msra.mxu0 0.0
        %1378 = vmatprep.subr.mxu0 0.0
        %1379 = vmatpush1.msra.mxu0 0.0
        %1380 = vmatprep.subr.mxu0 0.0
        %1381 = vmatpush1.msra.mxu0 0.0
        %1382 = vmatprep.subr.mxu0 0.0
        %1383 = vmatpush1.msra.mxu0 0.0
        %1384 = vmatprep.subr.mxu0 0.0
        %1385 = vmatpush1.msra.mxu0 0.0
        %1386 = vmatprep.subr.mxu0 0.0
        %1387 = vmatpush1.msra.mxu0 0.0
        %1388 = vmatprep.subr.mxu0 0.0
        %1389 = vmatpush1.msra.mxu0 0.0
        %1390 = vmatprep.subr.mxu0 0.0
        %1391 = vmatpush1.msra.mxu0 0.0
        %1392 = vmatprep.subr.mxu0 0.0
        %1393 = vmatpush1.msra.mxu0 0.0
        %1394 = vmatprep.subr.mxu0 0.0
        %1395 = vmatpush1.msra.mxu0 0.0
        %1396 = vmatprep.subr.mxu0 0.0
        %1397 = vmatpush1.msra.mxu0 0.0
        %1398 = vmatprep.subr.mxu0 0.0
        %1399 = vmatpush1.msra.mxu0 0.0
        %1400 = vmatprep.subr.mxu0 0.0
        %1401 = vmatpush1.msra.mxu0 0.0
        %1402 = vmatprep.subr.mxu0 0.0
        %1403 = vmatpush1.msra.mxu0 0.0
        %1404 = vmatprep.subr.mxu0 0.0
        %1405 = vmatpush1.msra.mxu0 0.0
        %1406 = vmatprep.subr.mxu0 0.0
        %1407 = vmatpush1.msra.mxu0 0.0
        %1408 = vmatprep.subr.mxu0 0.0
        %1409 = vmatpush1.msra.mxu0 0.0
        %1410 = vmatprep.subr.mxu0 0.0
        %1411 = vmatpush1.msra.mxu0 0.0
        %1412 = vmatprep.subr.mxu0 0.0
        %1413 = vmatpush1.msra.mxu0 0.0
        %1414 = vmatprep.subr.mxu0 0.0
        %1415 = vmatpush1.msra.mxu0 0.0
        %1416 = vmatprep.subr.mxu0 0.0
        %1417 = vmatpush1.msra.mxu0 0.0
        %1418 = vmatprep.subr.mxu0 0.0
        %1419 = vmatpush1.msra.mxu0 0.0
        %1420 = vmatprep.subr.mxu0 0.0
        %1421 = vmatpush1.msra.mxu0 0.0
        %1422 = vmatprep.subr.mxu0 0.0
        %1423 = vmatpush1.msra.mxu0 0.0
        %1424 = vmatprep.subr.mxu0 0.0
        %1425 = vmatpush1.msra.mxu0 0.0
        %1426 = vmatprep.mubr.f32.mxu0 0.0
        %1427 = vmatmul.mubr.f32.gmra.mrb[0].mxu0 %v1360
        %v1428 = vpop.f32.mrb[0].mxu0
        %v1429 = vadd.f32 0.0, %v1428
        %v1430 = vpop.f32.mrb[0].mxu0
        %1431 = vdwg.mxu0
        %1433 = vrot.lane.b32.xlu0 %v1429, 16
        %v1434 = vpop.permute.xlu0 %1433
        %v1436 = vsel %vm348, %v1262, %v1434
        %v1437 = vld [vmem:[%s1020 + $0x1] sm:$0x1]
        %v1438 = vlaneseq
        %v1439 = vshrl.u32 %v1438, 7
        %v1440 = vsub.s32 0, %v1439
        %v1441 = vrot.slane %v1437, %v1440
        %1446 = vrot.lane.b32.xlu0 %v1016, 32
        %v1447 = vpop.permute.xlu0 %1446
        %1448 = vrot.lane.b32.xlu0 %v1017, 32
        %v1449 = vpop.permute.xlu0 %1448
        %1450 = vrot.lane.b32.xlu0 %v1018, 32
        %v1451 = vpop.permute.xlu0 %1450
        %1452 = vrot.lane.b32.xlu0 %v1019, 32
        %v1453 = vpop.permute.xlu0 %1452
        %v1459 = vsel %vm237, %v1436, 0
        %1461 = vmatprep.subr.mxu0 0.0
        %1462 = vmatpush1.msra.mxu0 %v1447
        %1463 = vmatprep.subr.mxu0 0.0
        %1464 = vmatpush1.msra.mxu0 %v1449
        %1465 = vmatprep.subr.mxu0 0.0
        %1466 = vmatpush1.msra.mxu0 %v1451
        %1467 = vmatprep.subr.mxu0 0.0
        %1468 = vmatpush1.msra.mxu0 %v1453
        %1469 = vmatprep.subr.mxu0 0.0
        %1470 = vmatpush1.msra.mxu0 0.0
        %1471 = vmatprep.subr.mxu0 0.0
        %1472 = vmatpush1.msra.mxu0 0.0
        %1473 = vmatprep.subr.mxu0 0.0
        %1474 = vmatpush1.msra.mxu0 0.0
        %1475 = vmatprep.subr.mxu0 0.0
        %1476 = vmatpush1.msra.mxu0 0.0
        %1477 = vmatprep.subr.mxu0 0.0
        %1478 = vmatpush1.msra.mxu0 0.0
        %1479 = vmatprep.subr.mxu0 0.0
        %1480 = vmatpush1.msra.mxu0 0.0
        %1481 = vmatprep.subr.mxu0 0.0
        %1482 = vmatpush1.msra.mxu0 0.0
        %1483 = vmatprep.subr.mxu0 0.0
        %1484 = vmatpush1.msra.mxu0 0.0
        %1485 = vmatprep.subr.mxu0 0.0
        %1486 = vmatpush1.msra.mxu0 0.0
        %1487 = vmatprep.subr.mxu0 0.0
        %1488 = vmatpush1.msra.mxu0 0.0
        %1489 = vmatprep.subr.mxu0 0.0
        %1490 = vmatpush1.msra.mxu0 0.0
        %1491 = vmatprep.subr.mxu0 0.0
        %1492 = vmatpush1.msra.mxu0 0.0
        %1493 = vmatprep.subr.mxu0 0.0
        %1494 = vmatpush1.msra.mxu0 0.0
        %1495 = vmatprep.subr.mxu0 0.0
        %1496 = vmatpush1.msra.mxu0 0.0
        %1497 = vmatprep.subr.mxu0 0.0
        %1498 = vmatpush1.msra.mxu0 0.0
        %1499 = vmatprep.subr.mxu0 0.0
        %1500 = vmatpush1.msra.mxu0 0.0
        %1501 = vmatprep.subr.mxu0 0.0
        %1502 = vmatpush1.msra.mxu0 0.0
        %1503 = vmatprep.subr.mxu0 0.0
        %1504 = vmatpush1.msra.mxu0 0.0
        %1505 = vmatprep.subr.mxu0 0.0
        %1506 = vmatpush1.msra.mxu0 0.0
        %1507 = vmatprep.subr.mxu0 0.0
        %1508 = vmatpush1.msra.mxu0 0.0
        %1509 = vmatprep.subr.mxu0 0.0
        %1510 = vmatpush1.msra.mxu0 0.0
        %1511 = vmatprep.subr.mxu0 0.0
        %1512 = vmatpush1.msra.mxu0 0.0
        %1513 = vmatprep.subr.mxu0 0.0
        %1514 = vmatpush1.msra.mxu0 0.0
        %1515 = vmatprep.subr.mxu0 0.0
        %1516 = vmatpush1.msra.mxu0 0.0
        %1517 = vmatprep.subr.mxu0 0.0
        %1518 = vmatpush1.msra.mxu0 0.0
        %1519 = vmatprep.subr.mxu0 0.0
        %1520 = vmatpush1.msra.mxu0 0.0
        %1521 = vmatprep.subr.mxu0 0.0
        %1522 = vmatpush1.msra.mxu0 0.0
        %1523 = vmatprep.subr.mxu0 0.0
        %1524 = vmatpush1.msra.mxu0 0.0
        %1525 = vmatprep.mubr.f32.mxu0 0.0
        %1526 = vmatmul.mubr.f32.gmra.mrb[0].mxu0 %v1459
        %v1527 = vpop.f32.mrb[0].mxu0
        %v1528 = vadd.f32 %v1441, %v1527
        %v1529 = vpop.f32.mrb[0].mxu0
        %1530 = vdwg.mxu0
        %v1531 = vadd.f32 %v1528, %v1014
        %v1532 = vld [vmem:[%s1020 + $0x2] sm:$0x1]
        %v1533 = vld [vmem:[%s1020 + $0x3] sm:$0x1]
        %v1534 = vsel %vm237, %v1531, 0.0
        %1535 = vadd.xlane.f32.xlu0 %v1534
        %v1536 = vpop.xlane.xlu0 %1535
        %v1537 = vmul.f32 %v1536, %v241
        %v1538 = vsub.f32 %v1531, %v1537
        %v1539 = vmul.f32 %v1538, %v1538
        %v1540 = vsel %vm237, %v1539, 0.0
        %1541 = vadd.xlane.f32.xlu0 %v1540
        %v1542 = vpop.xlane.xlu0 %1541
        %v1543 = vmul.f32 %v1542, %v241
        %v1544 = vadd.f32 %v1543, 1e-12
        %v1545 = vrsqrt.pop %v1544
        %v1546 = vmul.f32 %v1538, %v1545
        %v1547 = vlaneseq
        %v1548 = vshrl.u32 %v1547, 7
        %v1549 = vsub.s32 0, %v1548
        %v1550 = vrot.slane %v1532, %v1549
        %v1551 = vmul.f32 %v1546, %v1550
        %v1552 = vlaneseq
        %v1553 = vshrl.u32 %v1552, 7
        %v1554 = vsub.s32 0, %v1553
        %v1555 = vrot.slane %v1533, %v1554
        %v1556 = vadd.f32 %v1551, %v1555
        %s1557 = scalar_lea.vmem %s3, 96
        %v1558 = vld [vmem:[%s1557] sm:$0xff]
        %v1559 = vld [vmem:[%s1557 + $0x8] sm:$0xff]
        %v1560 = vld [vmem:[%s1557 + $0x10] sm:$0xff]
        %v1561 = vld [vmem:[%s1557 + $0x18] sm:$0xff]
        %v1562 = vld [vmem:[%s1557 + $0x20] sm:$0xff]
        %v1563 = vld [vmem:[%s1557 + $0x28] sm:$0xff]
        %v1564 = vld [vmem:[%s1557 + $0x30] sm:$0xff]
        %v1565 = vld [vmem:[%s1557 + $0x38] sm:$0xff]
        %v1566 = vld [vmem:[%s1557 + $0x40] sm:$0xff]
        %v1567 = vld [vmem:[%s1557 + $0x48] sm:$0xff]
        %v1568 = vld [vmem:[%s1557 + $0x50] sm:$0xff]
        %v1569 = vld [vmem:[%s1557 + $0x58] sm:$0xff]
        %v1570 = vld [vmem:[%s1020 + $0x4] sm:$0x1]
        %v1571 = vlaneseq
        %v1572 = vshrl.u32 %v1571, 7
        %v1573 = vsub.s32 0, %v1572
        %v1574 = vrot.slane %v1570, %v1573
        %v1576 = vsel %vm237, %v1556, 0
        %1578 = vmatprep.subr.mxu0 0.0
        %1579 = vmatpush1.msra.mxu0 %v1558
        %1580 = vmatprep.subr.mxu0 0.0
        %1581 = vmatpush1.msra.mxu0 %v1559
        %1582 = vmatprep.subr.mxu0 0.0
        %1583 = vmatpush1.msra.mxu0 %v1560
        %1584 = vmatprep.subr.mxu0 0.0
        %1585 = vmatpush1.msra.mxu0 %v1561
        %1586 = vmatprep.subr.mxu0 0.0
        %1587 = vmatpush1.msra.mxu0 0.0
        %1588 = vmatprep.subr.mxu0 0.0
        %1589 = vmatpush1.msra.mxu0 0.0
        %1590 = vmatprep.subr.mxu0 0.0
        %1591 = vmatpush1.msra.mxu0 0.0
        %1592 = vmatprep.subr.mxu0 0.0
        %1593 = vmatpush1.msra.mxu0 0.0
        %1594 = vmatprep.subr.mxu0 0.0
        %1595 = vmatpush1.msra.mxu0 0.0
        %1596 = vmatprep.subr.mxu0 0.0
        %1597 = vmatpush1.msra.mxu0 0.0
        %1598 = vmatprep.subr.mxu0 0.0
        %1599 = vmatpush1.msra.mxu0 0.0
        %1600 = vmatprep.subr.mxu0 0.0
        %1601 = vmatpush1.msra.mxu0 0.0
        %1602 = vmatprep.subr.mxu0 0.0
        %1603 = vmatpush1.msra.mxu0 0.0
        %1604 = vmatprep.subr.mxu0 0.0
        %1605 = vmatpush1.msra.mxu0 0.0
        %1606 = vmatprep.subr.mxu0 0.0
        %1607 = vmatpush1.msra.mxu0 0.0
        %1608 = vmatprep.subr.mxu0 0.0
        %1609 = vmatpush1.msra.mxu0 0.0
        %1610 = vmatprep.subr.mxu0 0.0
        %1611 = vmatpush1.msra.mxu0 0.0
        %1612 = vmatprep.subr.mxu0 0.0
        %1613 = vmatpush1.msra.mxu0 0.0
        %1614 = vmatprep.subr.mxu0 0.0
        %1615 = vmatpush1.msra.mxu0 0.0
        %1616 = vmatprep.subr.mxu0 0.0
        %1617 = vmatpush1.msra.mxu0 0.0
        %1618 = vmatprep.subr.mxu0 0.0
        %1619 = vmatpush1.msra.mxu0 0.0
        %1620 = vmatprep.subr.mxu0 0.0
        %1621 = vmatpush1.msra.mxu0 0.0
        %1622 = vmatprep.subr.mxu0 0.0
        %1623 = vmatpush1.msra.mxu0 0.0
        %1624 = vmatprep.subr.mxu0 0.0
        %1625 = vmatpush1.msra.mxu0 0.0
        %1626 = vmatprep.subr.mxu0 0.0
        %1627 = vmatpush1.msra.mxu0 0.0
        %1628 = vmatprep.subr.mxu0 0.0
        %1629 = vmatpush1.msra.mxu0 0.0
        %1630 = vmatprep.subr.mxu0 0.0
        %1631 = vmatpush1.msra.mxu0 0.0
        %1632 = vmatprep.subr.mxu0 0.0
        %1633 = vmatpush1.msra.mxu0 0.0
        %1634 = vmatprep.subr.mxu0 0.0
        %1635 = vmatpush1.msra.mxu0 0.0
        %1636 = vmatprep.subr.mxu0 0.0
        %1637 = vmatpush1.msra.mxu0 0.0
        %1638 = vmatprep.subr.mxu0 0.0
        %1639 = vmatpush1.msra.mxu0 0.0
        %1640 = vmatprep.subr.mxu0 0.0
        %1641 = vmatpush1.msra.mxu0 0.0
        %1642 = vmatprep.mubr.f32.mxu0 0.0
        %1643 = vmatmul.mubr.f32.gmra.mrb[0].mxu0 %v1576
        %v1644 = vpop.f32.mrb[0].mxu0
        %v1645 = vadd.f32 %v1574, %v1644
        %v1646 = vpop.f32.mrb[0].mxu0
        %1647 = vdwg.mxu0
        %v1648 = vmul.f32 %v1645, 0.5
        %v1649 = vmul.f32 %v1645, 0.044715
        %v1650 = vmul.f32 %v1649, %v1645
        %v1651 = vmul.f32 %v1650, %v1645
        %v1652 = vadd.f32 %v1645, %v1651
        %v1653 = vmul.f32 %v1652, 0.7978846
        %v1654 = vtanh.pop %v1653
        %v1655 = vadd.f32 %v1654, 1.0
        %v1656 = vmul.f32 %v1648, %v1655
        %v1657 = vld [vmem:[%s1020 + $0x5] sm:$0x1]
        %v1658 = vlaneseq
        %v1659 = vshrl.u32 %v1658, 7
        %v1660 = vsub.s32 0, %v1659
        %v1661 = vrot.slane %v1657, %v1660
        %v1663 = vsel %vm915, %v1656, 0
        %1665 = vmatprep.subr.mxu0 0.0
        %1666 = vmatpush1.msra.mxu0 %v1562
        %1667 = vmatprep.subr.mxu0 0.0
        %1668 = vmatpush1.msra.mxu0 %v1563
        %1669 = vmatprep.subr.mxu0 0.0
        %1670 = vmatpush1.msra.mxu0 %v1564
        %1671 = vmatprep.subr.mxu0 0.0
        %1672 = vmatpush1.msra.mxu0 %v1565
        %1673 = vmatprep.subr.mxu0 0.0
        %1674 = vmatpush1.msra.mxu0 %v1566
        %1675 = vmatprep.subr.mxu0 0.0
        %1676 = vmatpush1.msra.mxu0 %v1567
        %1677 = vmatprep.subr.mxu0 0.0
        %1678 = vmatpush1.msra.mxu0 %v1568
        %1679 = vmatprep.subr.mxu0 0.0
        %1680 = vmatpush1.msra.mxu0 %v1569
        %1681 = vmatprep.subr.mxu0 0.0
        %1682 = vmatpush1.msra.mxu0 0.0
        %1683 = vmatprep.subr.mxu0 0.0
        %1684 = vmatpush1.msra.mxu0 0.0
        %1685 = vmatprep.subr.mxu0 0.0
        %1686 = vmatpush1.msra.mxu0 0.0
        %1687 = vmatprep.subr.mxu0 0.0
        %1688 = vmatpush1.msra.mxu0 0.0
        %1689 = vmatprep.subr.mxu0 0.0
        %1690 = vmatpush1.msra.mxu0 0.0
        %1691 = vmatprep.subr.mxu0 0.0
        %1692 = vmatpush1.msra.mxu0 0.0
        %1693 = vmatprep.subr.mxu0 0.0
        %1694 = vmatpush1.msra.mxu0 0.0
        %1695 = vmatprep.subr.mxu0 0.0
        %1696 = vmatpush1.msra.mxu0 0.0
        %1697 = vmatprep.subr.mxu0 0.0
        %1698 = vmatpush1.msra.mxu0 0.0
        %1699 = vmatprep.subr.mxu0 0.0
        %1700 = vmatpush1.msra.mxu0 0.0
        %1701 = vmatprep.subr.mxu0 0.0
        %1702 = vmatpush1.msra.mxu0 0.0
        %1703 = vmatprep.subr.mxu0 0.0
        %1704 = vmatpush1.msra.mxu0 0.0
        %1705 = vmatprep.subr.mxu0 0.0
        %1706 = vmatpush1.msra.mxu0 0.0
        %1707 = vmatprep.subr.mxu0 0.0
        %1708 = vmatpush1.msra.mxu0 0.0
        %1709 = vmatprep.subr.mxu0 0.0
        %1710 = vmatpush1.msra.mxu0 0.0
        %1711 = vmatprep.subr.mxu0 0.0
        %1712 = vmatpush1.msra.mxu0 0.0
        %1713 = vmatprep.subr.mxu0 0.0
        %1714 = vmatpush1.msra.mxu0 0.0
        %1715 = vmatprep.subr.mxu0 0.0
        %1716 = vmatpush1.msra.mxu0 0.0
        %1717 = vmatprep.subr.mxu0 0.0
        %1718 = vmatpush1.msra.mxu0 0.0
        %1719 = vmatprep.subr.mxu0 0.0
        %1720 = vmatpush1.msra.mxu0 0.0
        %1721 = vmatprep.subr.mxu0 0.0
        %1722 = vmatpush1.msra.mxu0 0.0
        %1723 = vmatprep.subr.mxu0 0.0
        %1724 = vmatpush1.msra.mxu0 0.0
        %1725 = vmatprep.subr.mxu0 0.0
        %1726 = vmatpush1.msra.mxu0 0.0
        %1727 = vmatprep.subr.mxu0 0.0
        %1728 = vmatpush1.msra.mxu0 0.0
        %1729 = vmatprep.mubr.f32.mxu0 0.0
        %1730 = vmatmul.mubr.f32.gmra.mrb[0].mxu0 %v1663
        %v1731 = vpop.f32.mrb[0].mxu0
        %v1732 = vadd.f32 %v1661, %v1731
        %v1733 = vpop.f32.mrb[0].mxu0
        %1734 = vdwg.mxu0
        %v1735 = vadd.f32 %v1732, %v1556
        %v1736 = vld [vmem:[%s1020 + $0x6] sm:$0x1]
        %v1737 = vld [vmem:[%s1020 + $0x7] sm:$0x1]
        %v1738 = vsel %vm237, %v1735, 0.0
        %1739 = vadd.xlane.f32.xlu0 %v1738
        %v1740 = vpop.xlane.xlu0 %1739
        %v1741 = vmul.f32 %v1740, %v241
        %v1742 = vsub.f32 %v1735, %v1741
        %v1743 = vmul.f32 %v1742, %v1742
        %v1744 = vsel %vm237, %v1743, 0.0
        %1745 = vadd.xlane.f32.xlu0 %v1744
        %v1746 = vpop.xlane.xlu0 %1745
        %v1747 = vmul.f32 %v1746, %v241
        %v1748 = vadd.f32 %v1747, 1e-12
        %v1749 = vrsqrt.pop %v1748
        %v1750 = vmul.f32 %v1742, %v1749
        %v1751 = vlaneseq
        %v1752 = vshrl.u32 %v1751, 7
        %v1753 = vsub.s32 0, %v1752
        %v1754 = vrot.slane %v1736, %v1753
        %v1755 = vmul.f32 %v1750, %v1754
        %v1756 = vlaneseq
        %v1757 = vshrl.u32 %v1756, 7
        %v1758 = vsub.s32 0, %v1757
        %v1759 = vrot.slane %v1737, %v1758
        %v1760 = vadd.f32 %v1755, %v1759
        %v1761 = vadd.f32 %v1760, %v1014
        %v1762 = vsel %vm237, %v1761, 0.0
        %v1763 = vrot.slane %v1762, 4
        %v1764 = vadd.f32 %v1762, %v1763
        %v1765 = vrot.slane %v1764, 2
        %v1766 = vadd.f32 %v1764, %v1765
        %v1767 = vrot.slane %v1766, 1
        %v1768 = vadd.f32 %v1766, %v1767
        %v1769 = vrcp.pop 8.0
        %v1770 = vmul.f32 %v1768, %v1769
        %vm1771 = vcmask 253952
        %1772 = vst.msk [vmem:[%s225] sm:$0x1] %vm1771, %v1770
        %s1773 = sand.u32 %s142, 1
        %s1774 = scalar_lea.sflag [#allocation3], %s1773
        %s1775 = sand.u32 %s142, 1
        %s1776 = scalar_lea.vmem [#allocation2], %s1775
        // Predicated region
        $region41: #{model_forward.1} parent=39 // pred_check
          %p1777 = pneg %p152
        $region42: #{model_forward.1} parent=39 // pred_check_branch
          %1779 = sbr.rel (%p1777) target = $region44
        $region43: #{model_forward.1} parent=39 // pred_region
          %s1781 = ssub.s32 16, 16
          %1782 = vsyncadd %s1774, %s1781
          %s1783 = smul.addr %s19, 16
          %s1784 = scalar_lea.hbm %s5, %s1783
          %s1786 = sshll.u32 %s1776, 4
          %s1787 = int_to_ptr.vmem [resolvable:$true] %s1786
          %1789 = dma.vmem_to_hbm [thread:$0]  %s1787, 16, %s1784, %s1774
        $region44: #{model_forward.1} parent=39 // pred_fallthru
          _
      $region40: #{model_forward.1} parent=5 // pred_fallthru
        _
      %p1790 = scmp.le.s32.totalorder 2, %s14
      // Predicated region
      $region45: #{model_forward.1} parent=5 // pred_check
        %p1791 = pneg %p1790
      $region46: #{model_forward.1} parent=5 // pred_check_branch
        %1793 = sbr.rel (%p1791) target = $region48
      $region47: #{model_forward.1} parent=5 // pred_region
        %s1794 = ssub.s32 %s14, 2
        // Predicated region
        $region49: #{model_forward.1} parent=47 // pred_check
          %p1795 = pneg %p158
        $region50: #{model_forward.1} parent=47 // pred_check_branch
          %1797 = sbr.rel (%p1795) target = $region52
        $region51: #{model_forward.1} parent=47 // pred_region
          %s1798 = sand.u32 %s143, 1
          %s1799 = scalar_lea.sflag [#allocation3], %s1798
          %s1800 = sand.u32 %s143, 1
          %s1801 = scalar_lea.vmem [#allocation2], %s1800
          %1802 = dma.done %s1799, 16
        $region52: #{model_forward.1} parent=47 // pred_fallthru
          _
      $region48: #{model_forward.1} parent=5 // pred_fallthru
        _
    $region6: #{model_forward.1} parent=1 // loop_footer
      %s18 = sadd.s32 1, %s14
    $region7: #{model_forward.1} parent=1 // loop_footer_branch
      %13 = sbr.rel target = $region3
    $region8: #{model_forward.1} parent=1 // loop_exit
      _
    %1803 = vsyncpa [#allocation3], 1
    %s1804 = scalar_lea.sflag [#allocation3], 1
    %1805 = vsyncpa %s1804, 1

</llo_original>
